<compile_context>
chip_gen: v6e
topology: v6e:2x2x1
jax: 0.10.0
libtpu: 0.0.40
codegen_flags: <defaults>
</compile_context>

<pallas_src>
import functools

import jax
import jax.numpy as jnp
from jax import lax
from jax.experimental import pallas as pl
from jax.experimental.pallas import tpu as pltpu

EPS = 1e-5
LANE = 128  # TPU lane width.


# ----------------------------- kernel helpers -----------------------------

def _seq_masks(T, L):
    """Multiplicative masks zeroing conv taps that cross a sequence boundary."""
    l_idx = lax.broadcasted_iota(jnp.int32, (T, 1), 0) % L
    keep_prev = (l_idx != 0).astype(jnp.float32)
    keep_next = (l_idx != (L - 1)).astype(jnp.float32)
    return keep_prev, keep_next


def _widen(h, lane=LANE):
    """Zero-pad channels (last dim) to 128 lanes — VMEM only, never HBM."""
    T, C = h.shape
    if C == lane:
        return h
    return jnp.concatenate([h, jnp.zeros((T, lane - C), h.dtype)], axis=1)


def _conv3_tap_packed(h, C, L, w_ref, b_row):
    """3-tap conv (padding=1) as a single MXU matmul, taps packed along K.

    h     : (T, C) activations for this row tile (tile = whole sequences)
    w_ref : (128, 128) weights; tap k occupies K-rows [k*C:(k+1)*C]
    b_row : (1, 128) bias row (zero-padded lanes)
    Returns (T, 128) f32; real output channels in lanes [0:Cout].
    """
    T = h.shape[0]
    keep_prev, keep_next = _seq_masks(T, L)
    h128 = _widen(h)                                        # real lanes [0:C], rest 0
    h_prev = pltpu.roll(h128, 1, axis=0) * keep_prev        # x[l-1] -> lanes [0:C]
    h_next = pltpu.roll(h128, T - 1, axis=0) * keep_next    # x[l+1]
    packed = (h_prev
              + pltpu.roll(h128, C, axis=1)                 # x[l]   -> lanes [C:2C]
              + pltpu.roll(h_next, 2 * C, axis=1))          # x[l+1] -> lanes [2C:3C]
    y = jnp.dot(packed.astype(w_ref.dtype), w_ref[...],
                preferred_element_type=jnp.float32)
    return y + b_row


def _tile_stats(h):
    """One-pass per-tile BN statistics: rows [sum ; sum of squares]."""
    s = jnp.sum(h, axis=0, keepdims=True)
    s2 = jnp.sum(h * h, axis=0, keepdims=True)
    return jnp.concatenate([s, s2], axis=0)                 # (2, 128)


# -------------------------------- kernels ---------------------------------

def _conv1_kernel(L, Cin, Cemb, x_ref, w_ref, b_ref, h_ref, stats_ref):
    h = _conv3_tap_packed(x_ref[...], Cin, L, w_ref, b_ref[...])    # (T, 128)
    h_ref[...] = h[:, :Cemb]
    stats_ref[...] = _tile_stats(h)


def _bn_relu_conv2_kernel(L, Cemb, Chid, h1_ref, sc_ref, sh_ref, w_ref, b_ref,
                          h2_ref, stats_ref):
    a = jnp.maximum(h1_ref[...] * sc_ref[...] + sh_ref[...], 0.0)   # BN1 + ReLU
    h2 = _conv3_tap_packed(a, Cemb, L, w_ref, b_ref[...])           # (T, 128)
    h2_ref[...] = h2[:, :Chid]
    stats_ref[...] = _tile_stats(h2)


def _bn_relu_kernel(h2_ref, sc_ref, sh_ref, o_ref):
    o_ref[...] = jnp.maximum(h2_ref[...] * sc_ref[...] + sh_ref[...], 0.0)


# -------------------------------- wrapper ----------------------------------

def _choose_tile_rows(N, L, target_rows):
    """Largest sequence-aligned row tile (multiple of 8 rows) <= target_rows."""
    best = None
    for seqs in range(1, N + 1):
        if N % seqs:
            continue
        rows = seqs * L
        if rows % 8 != 0 and rows != N * L:   # full-size block is always legal
            continue
        if best is None or rows <= target_rows:
            best = rows
    return best if best is not None else N * L


def _bn_affine(stats, count, gamma, beta):
    """Reduce per-tile stats -> per-channel BN scale/shift rows (training mode)."""
    C = gamma.shape[0]
    s = jnp.sum(stats[:, 0, :C], axis=0)
    s2 = jnp.sum(stats[:, 1, :C], axis=0)
    mean = s / count
    var = jnp.maximum(s2 / count - mean * mean, 0.0)        # biased variance
    scale = gamma.astype(jnp.float32) * lax.rsqrt(var + EPS)
    shift = beta.astype(jnp.float32) - mean * scale
    return scale.reshape(1, C), shift.reshape(1, C)


@functools.partial(jax.jit, static_argnames=("target_tile_rows", "matmul_dtype"))
def conv_forward(x, params, *, target_tile_rows=512, matmul_dtype=jnp.float32):
    """x: (N, C_in, L) float32 (PyTorch NCL). Returns (N, hidden_dim, L)."""
    w1, b1, g1, be1, w2, b2, g2, be2 = params
    N, Cin, L = x.shape
    Cemb, Chid = w1.shape[0], w2.shape[0]
    assert 3 * Cin <= LANE and 3 * Cemb <= LANE and Cemb <= LANE and Chid <= LANE
    R = N * L
    f32 = jnp.float32

    T = _choose_tile_rows(N, L, target_tile_rows)
    num_tiles = R // T

    # Channels-last rows at their REAL width (no host-side lane padding).
    x_rows = jnp.transpose(x, (0, 2, 1)).astype(f32).reshape(R, Cin)

    def prep_w(w):   # (O, I, 3) -> (128, 128): the 3 taps stacked along K
        O, I, K = w.shape
        wk = jnp.transpose(w, (2, 1, 0)).astype(f32).reshape(K * I, O)
        return jnp.pad(wk, ((0, LANE - K * I), (0, LANE - O))).astype(matmul_dtype)

    def prep_row(v):  # (C,) -> (1, 128) zero-padded bias row
        return jnp.pad(v.astype(f32).reshape(1, -1), ((0, 0), (0, LANE - v.shape[0])))

    w_spec = pl.BlockSpec((LANE, LANE), lambda t: (0, 0))
    brow_spec = pl.BlockSpec((1, LANE), lambda t: (0, 0))
    stats_spec = pl.BlockSpec((None, 2, LANE), lambda t: (t, 0, 0))
    cparams = pltpu.CompilerParams(
        dimension_semantics=("parallel",),          # megacore sharding on v7x
        vmem_limit_bytes=32 * 1024 * 1024,          # <= v7x's 64 MiB physical VMEM
    )

    # ---- pass 1: conv1 (+ per-tile BN1 statistics) ----
    h1, stats1 = pl.pallas_call(
        functools.partial(_conv1_kernel, L, Cin, Cemb),
        grid=(num_tiles,),
        in_specs=[pl.BlockSpec((T, Cin), lambda t: (t, 0)), w_spec, brow_spec],
        out_specs=[pl.BlockSpec((T, Cemb), lambda t: (t, 0)), stats_spec],
        out_shape=[jax.ShapeDtypeStruct((R, Cemb), f32),
                   jax.ShapeDtypeStruct((num_tiles, 2, LANE), f32)],
        compiler_params=cparams,
        cost_estimate=pl.CostEstimate(flops=2 * R * LANE * LANE, transcendentals=0,
                                      bytes_accessed=R * (Cin + Cemb) * 4),
    )(x_rows, prep_w(w1), prep_row(b1))
    scale1, shift1 = _bn_affine(stats1, R, g1, be1)

    # ---- pass 2: BN1 + ReLU + conv2 (+ per-tile BN2 statistics) ----
    h2, stats2 = pl.pallas_call(
        functools.partial(_bn_relu_conv2_kernel, L, Cemb, Chid),
        grid=(num_tiles,),
        in_specs=[pl.BlockSpec((T, Cemb), lambda t: (t, 0)),
                  pl.BlockSpec((1, Cemb), lambda t: (0, 0)),
                  pl.BlockSpec((1, Cemb), lambda t: (0, 0)),
                  w_spec, brow_spec],
        out_specs=[pl.BlockSpec((T, Chid), lambda t: (t, 0)), stats_spec],
        out_shape=[jax.ShapeDtypeStruct((R, Chid), f32),
                   jax.ShapeDtypeStruct((num_tiles, 2, LANE), f32)],
        compiler_params=cparams,
        cost_estimate=pl.CostEstimate(flops=2 * R * LANE * LANE, transcendentals=0,
                                      bytes_accessed=R * (Cemb + Chid) * 4),
    )(h1, scale1, shift1, prep_w(w2), prep_row(b2))
    scale2, shift2 = _bn_affine(stats2, R, g2, be2)

    # ---- pass 3: BN2 + ReLU ----
    out = pl.pallas_call(
        _bn_relu_kernel,
        grid=(num_tiles,),
        in_specs=[pl.BlockSpec((T, Chid), lambda t: (t, 0)),
                  pl.BlockSpec((1, Chid), lambda t: (0, 0)),
                  pl.BlockSpec((1, Chid), lambda t: (0, 0))],
        out_specs=pl.BlockSpec((T, Chid), lambda t: (t, 0)),
        out_shape=jax.ShapeDtypeStruct((R, Chid), f32),
        compiler_params=cparams,
        cost_estimate=pl.CostEstimate(flops=2 * R * Chid, transcendentals=0,
                                      bytes_accessed=2 * R * Chid * 4),
    )(h2, scale2, shift2)

    return jnp.transpose(out.reshape(N, L, Chid), (0, 2, 1))      # (N, Chid, L)


# ---------------- pure-JAX reference (PyTorch semantics) ----------------
def _ref_forward(x, params):
    w1, b1, g1, be1, w2, b2, g2, be2 = params

    def conv1d(h, w, b):  # cross-correlation, padding=1
        y = lax.conv_general_dilated(h, w, window_strides=(1,), padding=((1, 1),),
                                     dimension_numbers=("NCH", "OIH", "NCH"))
        return y + b[None, :, None]

    def bn_relu(h, g, be):  # training-mode batch stats, biased variance
        mean = jnp.mean(h, axis=(0, 2), keepdims=True)
        var = jnp.mean((h - mean) ** 2, axis=(0, 2), keepdims=True)
        hn = (h - mean) * lax.rsqrt(var + EPS)
        return jnp.maximum(hn * g[None, :, None] + be[None, :, None], 0.0)

    h = bn_relu(conv1d(x, w1, b1), g1, be1)
    return bn_relu(conv1d(h, w2, b2), g2, be2)


if __name__ == "__main__":
    # Small shapes consistent with the module: input_dim=4, emb=16, hidden=32.
    N, Cin, L = 2, 4, 16
    Cemb, Chid = 16, 32

    key = jax.random.PRNGKey(0)
    ks = jax.random.split(key, 9)
    x = jax.random.normal(ks[0], (N, Cin, L), jnp.float32)
    w1 = jax.random.normal(ks[1], (Cemb, Cin, 3), jnp.float32) * 0.2
    b1 = jax.random.normal(ks[2], (Cemb,), jnp.float32) * 0.1
    g1 = 1.0 + 0.1 * jax.random.normal(ks[3], (Cemb,), jnp.float32)
    be1 = 0.1 * jax.random.normal(ks[4], (Cemb,), jnp.float32)
    w2 = jax.random.normal(ks[5], (Chid, Cemb, 3), jnp.float32) * 0.2
    b2 = jax.random.normal(ks[6], (Chid,), jnp.float32) * 0.1
    g2 = 1.0 + 0.1 * jax.random.normal(ks[7], (Chid,), jnp.float32)
    be2 = 0.1 * jax.random.normal(ks[8], (Chid,), jnp.float32)
    params = (w1, b1, g1, be1, w2, b2, g2, be2)

    # target_tile_rows=16 -> 2 sequence-aligned tiles: exercises the pipelined,
    # "parallel" row grid even at this tiny demo size (default is 512 rows).
    out = jax.block_until_ready(conv_forward(x, params, target_tile_rows=16))
    ref = jax.block_until_ready(_ref_forward(x, params))

    assert out.shape == (N, Chid, L), out.shape
    err = float(jnp.max(jnp.abs(out - ref)))
    assert jnp.allclose(out, ref, atol=1e-4, rtol=1e-4), err
    print("KERNEL_OK")
</pallas_src>

<mosaic_0001>
module attributes {stable_mosaic.version = 11 : i64} {
  func.func @_conv1_kernel(%arg0: i32, %arg1: memref<16x4xf32, #tpu.memory_space<vmem>>, %arg2: memref<128x128xf32, #tpu.memory_space<vmem>>, %arg3: memref<1x128xf32, #tpu.memory_space<vmem>>, %arg4: memref<16x16xf32, #tpu.memory_space<vmem>>, %arg5: memref<1x2x128xf32, #tpu.memory_space<vmem>>) attributes {dimension_semantics = [#tpu.dimension_semantics<parallel>], iteration_bounds = array<i64: 2>, scalar_prefetch = 0 : i64, scratch_operands = 0 : i64, tpu.core_type = #tpu.core_type<tc>, window_params = [{transform_indices = @transform_0, window_bounds = array<i64: 16, 4>}, {pipeline_mode = #tpu.pipeline_mode<synchronous>, transform_indices = @transform_1, window_bounds = array<i64: 128, 128>}, {pipeline_mode = #tpu.pipeline_mode<synchronous>, transform_indices = @transform_2, window_bounds = array<i64: 1, 128>}, {transform_indices = @transform_3, window_bounds = array<i64: 16, 16>}, {transform_indices = @transform_4, window_bounds = array<i64: 1, 2, 128>}]} {
    %c0 = arith.constant 0 : index
    %c0_0 = arith.constant 0 : index
    %0 = vector.load %arg1[%c0, %c0_0] : memref<16x4xf32, #tpu.memory_space<vmem>>, vector<16x4xf32>
    %c0_1 = arith.constant 0 : index
    %c0_2 = arith.constant 0 : index
    %1 = vector.load %arg3[%c0_1, %c0_2] : memref<1x128xf32, #tpu.memory_space<vmem>>, vector<1x128xf32>
    %2 = tpu.iota {dimensions = array<i32: 0>} : vector<16x1xi32>
    %c16_i32 = arith.constant 16 : i32
    %c0_i32 = arith.constant 0 : i32
    %3 = arith.cmpi eq, %c16_i32, %c0_i32 : i32
    %c1_i32 = arith.constant 1 : i32
    %4 = arith.select %3, %c1_i32, %c16_i32 : i32
    %5 = vector.broadcast %4 : i32 to vector<16x1xi32>
    %6 = arith.remsi %2, %5 : vector<16x1xi32>
    %c0_i32_3 = arith.constant 0 : i32
    %7 = vector.broadcast %c0_i32_3 : i32 to vector<16x1xi32>
    %8 = arith.cmpi ne, %6, %7 : vector<16x1xi32>
    %c0_i32_4 = arith.constant 0 : i32
    %9 = vector.broadcast %c0_i32_4 : i32 to vector<16x1xi32>
    %10 = arith.cmpi slt, %6, %9 : vector<16x1xi32>
    %c0_i32_5 = arith.constant 0 : i32
    %11 = arith.cmpi slt, %4, %c0_i32_5 : i32
    %12 = vector.broadcast %11 : i1 to vector<16x1xi1>
    %13 = vector.broadcast %12 : vector<16x1xi1> to vector<16x1xi1>
    %14 = arith.xori %10, %13 : vector<16x1xi1>
    %15 = arith.andi %14, %8 : vector<16x1xi1>
    %16 = vector.broadcast %4 : i32 to vector<16x1xi32>
    %17 = arith.addi %6, %16 : vector<16x1xi32>
    %18 = arith.select %15, %17, %6 : vector<16x1xi1>, vector<16x1xi32>
    %c0_i32_6 = arith.constant 0 : i32
    %19 = vector.broadcast %c0_i32_6 : i32 to vector<16x1xi32>
    %20 = arith.cmpi ne, %18, %19 : vector<16x1xi32>
    %21 = arith.extui %20 : vector<16x1xi1> to vector<16x1xi32>
    %22 = arith.sitofp %21 : vector<16x1xi32> to vector<16x1xf32>
    %c15_i32 = arith.constant 15 : i32
    %23 = vector.broadcast %c15_i32 : i32 to vector<16x1xi32>
    %24 = arith.cmpi ne, %18, %23 : vector<16x1xi32>
    %25 = arith.extui %24 : vector<16x1xi1> to vector<16x1xi32>
    %26 = arith.sitofp %25 : vector<16x1xi32> to vector<16x1xf32>
    %cst = arith.constant 0.000000e+00 : f32
    %27 = vector.broadcast %cst : f32 to vector<16x124xf32>
    %28 = tpu.concatenate %0, %27 in 1 : vector<16x4xf32>, vector<16x124xf32> -> vector<16x128xf32>
    %c1_i32_7 = arith.constant 1 : i32
    %29 = tpu.dynamic_rotate %28 by %c1_i32_7 dim 0 : vector<16x128xf32>, i32 -> vector<16x128xf32>
    %30 = vector.broadcast %22 : vector<16x1xf32> to vector<16x128xf32>
    %31 = arith.mulf %29, %30 : vector<16x128xf32>
    %c15_i32_8 = arith.constant 15 : i32
    %32 = tpu.dynamic_rotate %28 by %c15_i32_8 dim 0 : vector<16x128xf32>, i32 -> vector<16x128xf32>
    %33 = vector.broadcast %26 : vector<16x1xf32> to vector<16x128xf32>
    %34 = arith.mulf %32, %33 : vector<16x128xf32>
    %c4_i32 = arith.constant 4 : i32
    %35 = tpu.dynamic_rotate %28 by %c4_i32 dim 1 : vector<16x128xf32>, i32 -> vector<16x128xf32>
    %36 = arith.addf %31, %35 : vector<16x128xf32>
    %c8_i32 = arith.constant 8 : i32
    %37 = tpu.dynamic_rotate %34 by %c8_i32 dim 1 : vector<16x128xf32>, i32 -> vector<16x128xf32>
    %38 = arith.addf %36, %37 : vector<16x128xf32>
    %c0_9 = arith.constant 0 : index
    %c0_10 = arith.constant 0 : index
    %39 = vector.load %arg2[%c0_9, %c0_10] : memref<128x128xf32, #tpu.memory_space<vmem>>, vector<128x128xf32>
    %cst_11 = arith.constant dense<0.000000e+00> : vector<16x128xf32>
    %40 = tpu.matmul %38, %39, %cst_11 {dimension_numbers = #tpu.dot_dimension_numbers<[1], [0], [0], [1], [0, 0, 1, 1], [], []>} : vector<16x128xf32>, vector<128x128xf32>, vector<16x128xf32> -> vector<16x128xf32>
    %41 = vector.broadcast %1 : vector<1x128xf32> to vector<16x128xf32>
    %42 = arith.addf %40, %41 : vector<16x128xf32>
    %43 = vector.extract_strided_slice %42 {offsets = [0, 0], sizes = [16, 16], strides = [1, 1]} : vector<16x128xf32> to vector<16x16xf32>
    %c0_12 = arith.constant 0 : index
    %c0_13 = arith.constant 0 : index
    %44 = vector.load %arg4[%c0_12, %c0_13] : memref<16x16xf32, #tpu.memory_space<vmem>>, vector<16x16xf32>
    tpu.vector_store %arg4[%c0_12, %c0_13], %43 {strides = array<i32>} : memref<16x16xf32, #tpu.memory_space<vmem>>, vector<16x16xf32>,
    %cst_14 = arith.constant dense<0.000000e+00> : vector<128xf32>
    %45 = vector.multi_reduction <add>, %42, %cst_14 [0] : vector<16x128xf32> to vector<128xf32>
    %46 = vector.shape_cast %45 : vector<128xf32> to vector<1x128xf32>
    %47 = arith.mulf %42, %42 : vector<16x128xf32>
    %cst_15 = arith.constant dense<0.000000e+00> : vector<128xf32>
    %48 = vector.multi_reduction <add>, %47, %cst_15 [0] : vector<16x128xf32> to vector<128xf32>
    %49 = vector.shape_cast %48 : vector<128xf32> to vector<1x128xf32>
    %50 = tpu.concatenate %46, %49 in 0 : vector<1x128xf32>, vector<1x128xf32> -> vector<2x128xf32>
    %c0_16 = arith.constant 0 : index
    %c0_17 = arith.constant 0 : index
    %c0_18 = arith.constant 0 : index
    %51 = vector.load %arg5[%c0_16, %c0_17, %c0_18] : memref<1x2x128xf32, #tpu.memory_space<vmem>>, vector<1x2x128xf32>
    %52 = vector.shape_cast %51 : vector<1x2x128xf32> to vector<2x128xf32>
    %53 = vector.shape_cast %50 : vector<2x128xf32> to vector<1x2x128xf32>
    tpu.vector_store %arg5[%c0_16, %c0_17, %c0_18], %53 {strides = array<i32>} : memref<1x2x128xf32, #tpu.memory_space<vmem>>, vector<1x2x128xf32>,
    return
  }
  func.func @transform_0(%arg0: i32) -> (i32, i32) {
    %c0_i32 = arith.constant 0 : i32
    %c0_i32_0 = arith.constant 0 : i32
    return %arg0, %c0_i32 : i32, i32
  }
  func.func @transform_1(%arg0: i32) -> (i32, i32) {
    %c0_i32 = arith.constant 0 : i32
    %c0_i32_0 = arith.constant 0 : i32
    %c0_i32_1 = arith.constant 0 : i32
    return %c0_i32, %c0_i32_0 : i32, i32
  }
  func.func @transform_2(%arg0: i32) -> (i32, i32) {
    %c0_i32 = arith.constant 0 : i32
    %c0_i32_0 = arith.constant 0 : i32
    %c0_i32_1 = arith.constant 0 : i32
    return %c0_i32, %c0_i32_0 : i32, i32
  }
  func.func @transform_3(%arg0: i32) -> (i32, i32) {
    %c0_i32 = arith.constant 0 : i32
    %c0_i32_0 = arith.constant 0 : i32
    return %arg0, %c0_i32 : i32, i32
  }
  func.func @transform_4(%arg0: i32) -> (i32, i32, i32) {
    %c0_i32 = arith.constant 0 : i32
    %c0_i32_0 = arith.constant 0 : i32
    %c0_i32_1 = arith.constant 0 : i32
    return %arg0, %c0_i32, %c0_i32_0 : i32, i32, i32
  }
}

module attributes {stable_mosaic.version = 11 : i64} {
  func.func @_bn_relu_conv2_kernel(%arg0: i32, %arg1: memref<16x16xf32, #tpu.memory_space<vmem>>, %arg2: memref<1x16xf32, #tpu.memory_space<vmem>>, %arg3: memref<1x16xf32, #tpu.memory_space<vmem>>, %arg4: memref<128x128xf32, #tpu.memory_space<vmem>>, %arg5: memref<1x128xf32, #tpu.memory_space<vmem>>, %arg6: memref<16x32xf32, #tpu.memory_space<vmem>>, %arg7: memref<1x2x128xf32, #tpu.memory_space<vmem>>) attributes {dimension_semantics = [#tpu.dimension_semantics<parallel>], iteration_bounds = array<i64: 2>, scalar_prefetch = 0 : i64, scratch_operands = 0 : i64, tpu.core_type = #tpu.core_type<tc>, window_params = [{transform_indices = @transform_0, window_bounds = array<i64: 16, 16>}, {pipeline_mode = #tpu.pipeline_mode<synchronous>, transform_indices = @transform_1, window_bounds = array<i64: 1, 16>}, {pipeline_mode = #tpu.pipeline_mode<synchronous>, transform_indices = @transform_2, window_bounds = array<i64: 1, 16>}, {pipeline_mode = #tpu.pipeline_mode<synchronous>, transform_indices = @transform_3, window_bounds = array<i64: 128, 128>}, {pipeline_mode = #tpu.pipeline_mode<synchronous>, transform_indices = @transform_4, window_bounds = array<i64: 1, 128>}, {transform_indices = @transform_5, window_bounds = array<i64: 16, 32>}, {transform_indices = @transform_6, window_bounds = array<i64: 1, 2, 128>}]} {
    %c0 = arith.constant 0 : index
    %c0_0 = arith.constant 0 : index
    %0 = vector.load %arg1[%c0, %c0_0] : memref<16x16xf32, #tpu.memory_space<vmem>>, vector<16x16xf32>
    %c0_1 = arith.constant 0 : index
    %c0_2 = arith.constant 0 : index
    %1 = vector.load %arg2[%c0_1, %c0_2] : memref<1x16xf32, #tpu.memory_space<vmem>>, vector<1x16xf32>
    %2 = vector.broadcast %1 : vector<1x16xf32> to vector<16x16xf32>
    %3 = arith.mulf %0, %2 : vector<16x16xf32>
    %c0_3 = arith.constant 0 : index
    %c0_4 = arith.constant 0 : index
    %4 = vector.load %arg3[%c0_3, %c0_4] : memref<1x16xf32, #tpu.memory_space<vmem>>, vector<1x16xf32>
    %5 = vector.broadcast %4 : vector<1x16xf32> to vector<16x16xf32>
    %6 = arith.addf %3, %5 : vector<16x16xf32>
    %cst = arith.constant 0.000000e+00 : f32
    %7 = vector.broadcast %cst : f32 to vector<16x16xf32>
    %8 = arith.maximumf %6, %7 : vector<16x16xf32>
    %c0_5 = arith.constant 0 : index
    %c0_6 = arith.constant 0 : index
    %9 = vector.load %arg5[%c0_5, %c0_6] : memref<1x128xf32, #tpu.memory_space<vmem>>, vector<1x128xf32>
    %10 = tpu.iota {dimensions = array<i32: 0>} : vector<16x1xi32>
    %c16_i32 = arith.constant 16 : i32
    %c0_i32 = arith.constant 0 : i32
    %11 = arith.cmpi eq, %c16_i32, %c0_i32 : i32
    %c1_i32 = arith.constant 1 : i32
    %12 = arith.select %11, %c1_i32, %c16_i32 : i32
    %13 = vector.broadcast %12 : i32 to vector<16x1xi32>
    %14 = arith.remsi %10, %13 : vector<16x1xi32>
    %c0_i32_7 = arith.constant 0 : i32
    %15 = vector.broadcast %c0_i32_7 : i32 to vector<16x1xi32>
    %16 = arith.cmpi ne, %14, %15 : vector<16x1xi32>
    %c0_i32_8 = arith.constant 0 : i32
    %17 = vector.broadcast %c0_i32_8 : i32 to vector<16x1xi32>
    %18 = arith.cmpi slt, %14, %17 : vector<16x1xi32>
    %c0_i32_9 = arith.constant 0 : i32
    %19 = arith.cmpi slt, %12, %c0_i32_9 : i32
    %20 = vector.broadcast %19 : i1 to vector<16x1xi1>
    %21 = vector.broadcast %20 : vector<16x1xi1> to vector<16x1xi1>
    %22 = arith.xori %18, %21 : vector<16x1xi1>
    %23 = arith.andi %22, %16 : vector<16x1xi1>
    %24 = vector.broadcast %12 : i32 to vector<16x1xi32>
    %25 = arith.addi %14, %24 : vector<16x1xi32>
    %26 = arith.select %23, %25, %14 : vector<16x1xi1>, vector<16x1xi32>
    %c0_i32_10 = arith.constant 0 : i32
    %27 = vector.broadcast %c0_i32_10 : i32 to vector<16x1xi32>
    %28 = arith.cmpi ne, %26, %27 : vector<16x1xi32>
    %29 = arith.extui %28 : vector<16x1xi1> to vector<16x1xi32>
    %30 = arith.sitofp %29 : vector<16x1xi32> to vector<16x1xf32>
    %c15_i32 = arith.constant 15 : i32
    %31 = vector.broadcast %c15_i32 : i32 to vector<16x1xi32>
    %32 = arith.cmpi ne, %26, %31 : vector<16x1xi32>
    %33 = arith.extui %32 : vector<16x1xi1> to vector<16x1xi32>
    %34 = arith.sitofp %33 : vector<16x1xi32> to vector<16x1xf32>
    %cst_11 = arith.constant 0.000000e+00 : f32
    %35 = vector.broadcast %cst_11 : f32 to vector<16x112xf32>
    %36 = tpu.concatenate %8, %35 in 1 : vector<16x16xf32>, vector<16x112xf32> -> vector<16x128xf32>
    %c1_i32_12 = arith.constant 1 : i32
    %37 = tpu.dynamic_rotate %36 by %c1_i32_12 dim 0 : vector<16x128xf32>, i32 -> vector<16x128xf32>
    %38 = vector.broadcast %30 : vector<16x1xf32> to vector<16x128xf32>
    %39 = arith.mulf %37, %38 : vector<16x128xf32>
    %c15_i32_13 = arith.constant 15 : i32
    %40 = tpu.dynamic_rotate %36 by %c15_i32_13 dim 0 : vector<16x128xf32>, i32 -> vector<16x128xf32>
    %41 = vector.broadcast %34 : vector<16x1xf32> to vector<16x128xf32>
    %42 = arith.mulf %40, %41 : vector<16x128xf32>
    %c16_i32_14 = arith.constant 16 : i32
    %43 = tpu.dynamic_rotate %36 by %c16_i32_14 dim 1 : vector<16x128xf32>, i32 -> vector<16x128xf32>
    %44 = arith.addf %39, %43 : vector<16x128xf32>
    %c32_i32 = arith.constant 32 : i32
    %45 = tpu.dynamic_rotate %42 by %c32_i32 dim 1 : vector<16x128xf32>, i32 -> vector<16x128xf32>
    %46 = arith.addf %44, %45 : vector<16x128xf32>
    %c0_15 = arith.constant 0 : index
    %c0_16 = arith.constant 0 : index
    %47 = vector.load %arg4[%c0_15, %c0_16] : memref<128x128xf32, #tpu.memory_space<vmem>>, vector<128x128xf32>
    %cst_17 = arith.constant dense<0.000000e+00> : vector<16x128xf32>
    %48 = tpu.matmul %46, %47, %cst_17 {dimension_numbers = #tpu.dot_dimension_numbers<[1], [0], [0], [1], [0, 0, 1, 1], [], []>} : vector<16x128xf32>, vector<128x128xf32>, vector<16x128xf32> -> vector<16x128xf32>
    %49 = vector.broadcast %9 : vector<1x128xf32> to vector<16x128xf32>
    %50 = arith.addf %48, %49 : vector<16x128xf32>
    %51 = vector.extract_strided_slice %50 {offsets = [0, 0], sizes = [16, 32], strides = [1, 1]} : vector<16x128xf32> to vector<16x32xf32>
    %c0_18 = arith.constant 0 : index
    %c0_19 = arith.constant 0 : index
    %52 = vector.load %arg6[%c0_18, %c0_19] : memref<16x32xf32, #tpu.memory_space<vmem>>, vector<16x32xf32>
    tpu.vector_store %arg6[%c0_18, %c0_19], %51 {strides = array<i32>} : memref<16x32xf32, #tpu.memory_space<vmem>>, vector<16x32xf32>,
    %cst_20 = arith.constant dense<0.000000e+00> : vector<128xf32>
    %53 = vector.multi_reduction <add>, %50, %cst_20 [0] : vector<16x128xf32> to vector<128xf32>
    %54 = vector.shape_cast %53 : vector<128xf32> to vector<1x128xf32>
    %55 = arith.mulf %50, %50 : vector<16x128xf32>
    %cst_21 = arith.constant dense<0.000000e+00> : vector<128xf32>
    %56 = vector.multi_reduction <add>, %55, %cst_21 [0] : vector<16x128xf32> to vector<128xf32>
    %57 = vector.shape_cast %56 : vector<128xf32> to vector<1x128xf32>
    %58 = tpu.concatenate %54, %57 in 0 : vector<1x128xf32>, vector<1x128xf32> -> vector<2x128xf32>
    %c0_22 = arith.constant 0 : index
    %c0_23 = arith.constant 0 : index
    %c0_24 = arith.constant 0 : index
    %59 = vector.load %arg7[%c0_22, %c0_23, %c0_24] : memref<1x2x128xf32, #tpu.memory_space<vmem>>, vector<1x2x128xf32>
    %60 = vector.shape_cast %59 : vector<1x2x128xf32> to vector<2x128xf32>
    %61 = vector.shape_cast %58 : vector<2x128xf32> to vector<1x2x128xf32>
    tpu.vector_store %arg7[%c0_22, %c0_23, %c0_24], %61 {strides = array<i32>} : memref<1x2x128xf32, #tpu.memory_space<vmem>>, vector<1x2x128xf32>,
    return
  }
  func.func @transform_0(%arg0: i32) -> (i32, i32) {
    %c0_i32 = arith.constant 0 : i32
    %c0_i32_0 = arith.constant 0 : i32
    return %arg0, %c0_i32 : i32, i32
  }
  func.func @transform_1(%arg0: i32) -> (i32, i32) {
    %c0_i32 = arith.constant 0 : i32
    %c0_i32_0 = arith.constant 0 : i32
    %c0_i32_1 = arith.constant 0 : i32
    return %c0_i32, %c0_i32_0 : i32, i32
  }
  func.func @transform_2(%arg0: i32) -> (i32, i32) {
    %c0_i32 = arith.constant 0 : i32
    %c0_i32_0 = arith.constant 0 : i32
    %c0_i32_1 = arith.constant 0 : i32
    return %c0_i32, %c0_i32_0 : i32, i32
  }
  func.func @transform_3(%arg0: i32) -> (i32, i32) {
    %c0_i32 = arith.constant 0 : i32
    %c0_i32_0 = arith.constant 0 : i32
    %c0_i32_1 = arith.constant 0 : i32
    return %c0_i32, %c0_i32_0 : i32, i32
  }
  func.func @transform_4(%arg0: i32) -> (i32, i32) {
    %c0_i32 = arith.constant 0 : i32
    %c0_i32_0 = arith.constant 0 : i32
    %c0_i32_1 = arith.constant 0 : i32
    return %c0_i32, %c0_i32_0 : i32, i32
  }
  func.func @transform_5(%arg0: i32) -> (i32, i32) {
    %c0_i32 = arith.constant 0 : i32
    %c0_i32_0 = arith.constant 0 : i32
    return %arg0, %c0_i32 : i32, i32
  }
  func.func @transform_6(%arg0: i32) -> (i32, i32, i32) {
    %c0_i32 = arith.constant 0 : i32
    %c0_i32_0 = arith.constant 0 : i32
    %c0_i32_1 = arith.constant 0 : i32
    return %arg0, %c0_i32, %c0_i32_0 : i32, i32, i32
  }
}

module attributes {stable_mosaic.version = 11 : i64} {
  func.func @_bn_relu_kernel(%arg0: i32, %arg1: memref<16x32xf32, #tpu.memory_space<vmem>>, %arg2: memref<1x32xf32, #tpu.memory_space<vmem>>, %arg3: memref<1x32xf32, #tpu.memory_space<vmem>>, %arg4: memref<16x32xf32, #tpu.memory_space<vmem>>) attributes {dimension_semantics = [#tpu.dimension_semantics<parallel>], iteration_bounds = array<i64: 2>, scalar_prefetch = 0 : i64, scratch_operands = 0 : i64, tpu.core_type = #tpu.core_type<tc>, window_params = [{transform_indices = @transform_0, window_bounds = array<i64: 16, 32>}, {pipeline_mode = #tpu.pipeline_mode<synchronous>, transform_indices = @transform_1, window_bounds = array<i64: 1, 32>}, {pipeline_mode = #tpu.pipeline_mode<synchronous>, transform_indices = @transform_2, window_bounds = array<i64: 1, 32>}, {transform_indices = @transform_3, window_bounds = array<i64: 16, 32>}]} {
    %c0 = arith.constant 0 : index
    %c0_0 = arith.constant 0 : index
    %0 = vector.load %arg1[%c0, %c0_0] : memref<16x32xf32, #tpu.memory_space<vmem>>, vector<16x32xf32>
    %c0_1 = arith.constant 0 : index
    %c0_2 = arith.constant 0 : index
    %1 = vector.load %arg2[%c0_1, %c0_2] : memref<1x32xf32, #tpu.memory_space<vmem>>, vector<1x32xf32>
    %2 = vector.broadcast %1 : vector<1x32xf32> to vector<16x32xf32>
    %3 = arith.mulf %0, %2 : vector<16x32xf32>
    %c0_3 = arith.constant 0 : index
    %c0_4 = arith.constant 0 : index
    %4 = vector.load %arg3[%c0_3, %c0_4] : memref<1x32xf32, #tpu.memory_space<vmem>>, vector<1x32xf32>
    %5 = vector.broadcast %4 : vector<1x32xf32> to vector<16x32xf32>
    %6 = arith.addf %3, %5 : vector<16x32xf32>
    %cst = arith.constant 0.000000e+00 : f32
    %7 = vector.broadcast %cst : f32 to vector<16x32xf32>
    %8 = arith.maximumf %6, %7 : vector<16x32xf32>
    %c0_5 = arith.constant 0 : index
    %c0_6 = arith.constant 0 : index
    %9 = vector.load %arg4[%c0_5, %c0_6] : memref<16x32xf32, #tpu.memory_space<vmem>>, vector<16x32xf32>
    tpu.vector_store %arg4[%c0_5, %c0_6], %8 {strides = array<i32>} : memref<16x32xf32, #tpu.memory_space<vmem>>, vector<16x32xf32>,
    return
  }
  func.func @transform_0(%arg0: i32) -> (i32, i32) {
    %c0_i32 = arith.constant 0 : i32
    %c0_i32_0 = arith.constant 0 : i32
    return %arg0, %c0_i32 : i32, i32
  }
  func.func @transform_1(%arg0: i32) -> (i32, i32) {
    %c0_i32 = arith.constant 0 : i32
    %c0_i32_0 = arith.constant 0 : i32
    %c0_i32_1 = arith.constant 0 : i32
    return %c0_i32, %c0_i32_0 : i32, i32
  }
  func.func @transform_2(%arg0: i32) -> (i32, i32) {
    %c0_i32 = arith.constant 0 : i32
    %c0_i32_0 = arith.constant 0 : i32
    %c0_i32_1 = arith.constant 0 : i32
    return %c0_i32, %c0_i32_0 : i32, i32
  }
  func.func @transform_3(%arg0: i32) -> (i32, i32) {
    %c0_i32 = arith.constant 0 : i32
    %c0_i32_0 = arith.constant 0 : i32
    return %arg0, %c0_i32 : i32, i32
  }
}

</mosaic_0001>

<llo_original>
// kernel: conv_forward.5
$region0: #{conv_forward.5}
  #allocation0 [shape = 'u32[]', space=smem, size = 0x4, offset = 0x4, fixed_abs, tag = 'smem constant byte address 0x4 - core index']
  #allocation1 [shape = 'u32[144,128]{1,0:T(1,128)}', space=vmem, size = 0x12000, scoped, tag = 'internal scratch']
  %s0 = inlined_call_operand.vmem [shape: f32[32,32], index: 0, kind: input, shape index: {}]
  %s1 = inlined_call_operand.vmem [shape: f32[1,32], index: 1, kind: input, shape index: {}]
  %s2 = inlined_call_operand.vmem [shape: f32[1,32], index: 2, kind: input, shape index: {}]
  %s3 = inlined_call_operand.hbm [shape: f32[32,32], index: 3, kind: output, shape index: {}]
  %s4 = sld [smem:[#allocation0]]
  $region45: #{conv_forward.5} parent=0
    _
  %s6 = ssub.s32 1, %s4
  %s7 = scalar_select 0, %s6, %s4
  $region1: #{conv_forward.5} parent=0
    #allocation2 [shape = 'u8[16384]{0}', space=vmem, size = 0x4000, scoped, tag = 'output window, operand 0']
    #allocation3 [shape = 's32[2]{0}', space=sflag, size = 0x8, scoped, tag = 'scoped memory for conv_forward.5']
    %8 = vsyncpa [#allocation3], 0
    %s9 = scalar_lea.sflag [#allocation3], 1
    %10 = vsyncpa %s9, 0
    loop: start=0, step=1, limit=4
    $region2: #{conv_forward.5} parent=1 // loop_pre_header
      _
    $region3: #{conv_forward.5} parent=1 // loop_header
      %s12 = sphi 0, %s16
      %p13 = scmp.ge.s32.totalorder %s12, 4
      %s22 = sphi 0, %s24
      %s25 = sphi 0, %s22
      %s26 = sphi 0, %s25
      %s42 = sphi 0, %s26
      %s46 = sphi 0, %s46
      %s48 = sphi 0, %s46
      %s49 = sphi 0, %s48
      %s63 = sphi 0, %s49
      %s67 = sphi 0, %s67
      %s69 = sphi 0, %s67
      %s70 = sphi 0, %s69
      %s84 = sphi 0, %s70
      %s90 = sphi 0, %s92
      %s93 = sphi 0, %s90
      %s94 = sphi 0, %s93
      %s110 = sphi 0, %s94
    $region4: #{conv_forward.5} parent=1 // loop_header_branch
      %15 = sbr.rel (%p13) target = $region8
    $region5: #{conv_forward.5} parent=1 // loop_body
      %s17 = ssub.s32 %s12, 1
      %s18 = ssub.s32 %s12, 2
      %s19 = sadd.s32 %s12, 1
      %s20 = ssub.s32 %s12, %s19
      %p21 = scmp.eq.s32.totalorder %s20, 0
      %s23 = sadd.s32 %s22, 1
      %s24 = scalar_select %p21, %s22, %s23
      %p27 = pneg %p21
      %p28 = scmp.eq.s32.totalorder %s12, 1
      %p29 = por %p27, %p28
      %p30 = scmp.ne.s32.totalorder %s22, %s25
      %p31 = scmp.eq.s32.totalorder %s12, 0
      %p32 = por %p30, %p31
      %p33 = scmp.ne.s32.totalorder %s22, %s25
      %p34 = scmp.eq.s32.totalorder %s17, 1
      %p35 = por %p33, %p34
      %p36 = scmp.ne.s32.totalorder %s25, %s26
      %p37 = scmp.eq.s32.totalorder %s17, 0
      %p38 = por %p36, %p37
      %p39 = scmp.ne.s32.totalorder %s25, %s26
      %p40 = scmp.eq.s32.totalorder %s18, 1
      %p41 = por %p39, %p40
      %p43 = scmp.ne.s32.totalorder %s26, %s42
      %p44 = scmp.eq.s32.totalorder %s18, 0
      %p45 = por %p43, %p44
      %s47 = sadd.s32 %s46, 1
      %p50 = scmp.eq.s32.totalorder %s12, 1
      %p51 = scmp.ne.s32.totalorder %s46, %s48
      %p52 = scmp.eq.s32.totalorder %s12, 0
      %p53 = por %p51, %p52
      %p54 = scmp.ne.s32.totalorder %s46, %s48
      %p55 = scmp.eq.s32.totalorder %s17, 1
      %p56 = por %p54, %p55
      %p57 = scmp.ne.s32.totalorder %s48, %s49
      %p58 = scmp.eq.s32.totalorder %s17, 0
      %p59 = por %p57, %p58
      %p60 = scmp.ne.s32.totalorder %s48, %s49
      %p61 = scmp.eq.s32.totalorder %s18, 1
      %p62 = por %p60, %p61
      %p64 = scmp.ne.s32.totalorder %s49, %s63
      %p65 = scmp.eq.s32.totalorder %s18, 0
      %p66 = por %p64, %p65
      %s68 = sadd.s32 %s67, 1
      %p71 = scmp.eq.s32.totalorder %s12, 1
      %p72 = scmp.ne.s32.totalorder %s67, %s69
      %p73 = scmp.eq.s32.totalorder %s12, 0
      %p74 = por %p72, %p73
      %p75 = scmp.ne.s32.totalorder %s67, %s69
      %p76 = scmp.eq.s32.totalorder %s17, 1
      %p77 = por %p75, %p76
      %p78 = scmp.ne.s32.totalorder %s69, %s70
      %p79 = scmp.eq.s32.totalorder %s17, 0
      %p80 = por %p78, %p79
      %p81 = scmp.ne.s32.totalorder %s69, %s70
      %p82 = scmp.eq.s32.totalorder %s18, 1
      %p83 = por %p81, %p82
      %p85 = scmp.ne.s32.totalorder %s70, %s84
      %p86 = scmp.eq.s32.totalorder %s18, 0
      %p87 = por %p85, %p86
      %s88 = ssub.s32 %s12, %s19
      %p89 = scmp.eq.s32.totalorder %s88, 0
      %s91 = sadd.s32 %s90, 1
      %s92 = scalar_select %p89, %s90, %s91
      %p95 = pneg %p89
      %p96 = scmp.eq.s32.totalorder %s12, 1
      %p97 = por %p95, %p96
      %p98 = scmp.ne.s32.totalorder %s90, %s93
      %p99 = scmp.eq.s32.totalorder %s12, 0
      %p100 = por %p98, %p99
      %p101 = scmp.ne.s32.totalorder %s90, %s93
      %p102 = scmp.eq.s32.totalorder %s17, 1
      %p103 = por %p101, %p102
      %p104 = scmp.ne.s32.totalorder %s93, %s94
      %p105 = scmp.eq.s32.totalorder %s17, 0
      %p106 = por %p104, %p105
      %p107 = scmp.ne.s32.totalorder %s93, %s94
      %p108 = scmp.eq.s32.totalorder %s18, 1
      %p109 = por %p107, %p108
      %p111 = scmp.ne.s32.totalorder %s94, %s110
      %p112 = scmp.eq.s32.totalorder %s18, 0
      %p113 = por %p111, %p112
      %p114 = scmp.le.s32.totalorder 1, %s12
      %p115 = scmp.lt.s32.totalorder %s12, 3
      %p116 = pnand %p114, %p115
      %p117 = pneg %p116
      // Predicated region
      $region9: #{conv_forward.5} parent=5 // pred_check
        _
      $region10: #{conv_forward.5} parent=5 // pred_check_branch
        %119 = sbr.rel (%p116) target = $region12
      $region11: #{conv_forward.5} parent=5 // pred_region
        %s120 = ssub.s32 %s12, 1
        // Predicated region
        $region13: #{conv_forward.5} parent=11 // pred_check
          %p121 = pneg %p59
        $region14: #{conv_forward.5} parent=11 // pred_check_branch
          %123 = sbr.rel (%p121) target = $region16
        $region15: #{conv_forward.5} parent=11 // pred_region
          _
        $region16: #{conv_forward.5} parent=11 // pred_fallthru
          _
        // Predicated region
        $region17: #{conv_forward.5} parent=11 // pred_check
          %p124 = pneg %p80
        $region18: #{conv_forward.5} parent=11 // pred_check_branch
          %126 = sbr.rel (%p124) target = $region20
        $region19: #{conv_forward.5} parent=11 // pred_region
          _
        $region20: #{conv_forward.5} parent=11 // pred_fallthru
          _
      $region12: #{conv_forward.5} parent=5 // pred_fallthru
        _
      %p127 = scmp.lt.s32.totalorder %s12, 2
      // Predicated region
      $region21: #{conv_forward.5} parent=5 // pred_check
        %p128 = pneg %p127
      $region22: #{conv_forward.5} parent=5 // pred_check_branch
        %130 = sbr.rel (%p128) target = $region24
      $region23: #{conv_forward.5} parent=5 // pred_region
        // Predicated region
        $region25: #{conv_forward.5} parent=23 // pred_check
          %p131 = pneg %p32
        $region26: #{conv_forward.5} parent=23 // pred_check_branch
          %133 = sbr.rel (%p131) target = $region28
        $region27: #{conv_forward.5} parent=23 // pred_region
          %s134 = smul.u32 2, %s12
          %p135 = scmp.lt.s32.totalorder %s134, 3
          %s136 = scalar_select %p135, %s134, 3
          %s137 = smul.addr %s136, 8
          %s138 = scalar_lea.vmem %s0, %s137
          %s139 = smul.u32 2, %s12
        $region28: #{conv_forward.5} parent=23 // pred_fallthru
          _
      $region24: #{conv_forward.5} parent=5 // pred_fallthru
        _
      %p140 = scmp.le.s32.totalorder 1, %s12
      %p141 = scmp.lt.s32.totalorder %s12, 3
      %p142 = pnand %p140, %p141
      %p143 = pneg %p142
      // Predicated region
      $region29: #{conv_forward.5} parent=5 // pred_check
        _
      $region30: #{conv_forward.5} parent=5 // pred_check_branch
        %145 = sbr.rel (%p142) target = $region32
      $region31: #{conv_forward.5} parent=5 // pred_region
        %s146 = ssub.s32 %s12, 1
        %s147 = smul.u32 2, %s17
        %p148 = scmp.lt.s32.totalorder %s147, 3
        %s149 = scalar_select %p148, %s147, 3
        %s150 = smul.addr %s149, 8
        %s151 = scalar_lea.vmem %s0, %s150
        %p152 = pneg %p38
        %p153 = pneg %p35
        %p154 = pneg %p59
        %p155 = pneg %p56
        %p156 = pneg %p80
        %p157 = pneg %p77
        %p158 = pneg %p106
        %p159 = pneg %p103
        %s160 = sand.u32 %s93, 1
        %s161 = scalar_lea.sflag [#allocation3], %s160
        %s162 = sand.u32 %s93, 1
        %s163 = smul.addr %s162, 16
        %s164 = scalar_lea.vmem [#allocation2], %s163
        %s165 = smul.u32 2, %s17
        %p166 = scmp.lt.s32.totalorder %s165, 3
        %s167 = scalar_select %p166, %s165, 3
        %s168 = smul.addr %s167, 8
        %s169 = scalar_lea.vmem %s0, %s168
        %s170 = smul.u32 2, %s17
        %s171 = smul.u32 2, %s17
        %v172 = vld [vmem:[%s169] sm:$0xff]
        %v173 = vld [vmem:[%s169 + $0x8] sm:$0xff]
        %v174 = vld [vmem:[%s1] sm:$0x1]
        %v176 = vlaneseq
        %v177 = vshrl.u32 %v176, 7
        %v178 = vsub.s32 0, %v177
        %v179 = vrot.slane %v174, %v178
        %v181 = vmul.f32 %v172, %v179
        %v182 = vmul.f32 %v173, %v179
        %v183 = vld [vmem:[%s2] sm:$0x1]
        %v185 = vlaneseq
        %v186 = vshrl.u32 %v185, 7
        %v187 = vsub.s32 0, %v186
        %v188 = vrot.slane %v183, %v187
        %v190 = vadd.f32 %v181, %v188
        %v191 = vadd.f32 %v182, %v188
        %v192 = vmax.f32 %v190, 0.0
        %v193 = vmax.f32 %v191, 0.0
        %vm194 = vcmask 261120
        %195 = vst.msk [vmem:[%s164] sm:$0xff] %vm194, %v192
        %196 = vst.msk [vmem:[%s164 + $0x8] sm:$0xff] %vm194, %v193
        %s197 = sand.u32 %s93, 1
        %s198 = scalar_lea.sflag [#allocation3], %s197
        %s199 = sand.u32 %s93, 1
        %s200 = smul.addr %s199, 16
        %s201 = scalar_lea.vmem [#allocation2], %s200
        // Predicated region
        $region33: #{conv_forward.5} parent=31 // pred_check
          %p202 = pneg %p103
        $region34: #{conv_forward.5} parent=31 // pred_check_branch
          %204 = sbr.rel (%p202) target = $region36
        $region35: #{conv_forward.5} parent=31 // pred_region
          %s205 = smul.u32 2, %s17
          %s207 = ssub.s32 256, 256
          %208 = vsyncadd %s198, %s207
          %s209 = smul.addr %s205, 128
          %s210 = scalar_lea.hbm %s3, %s209
          %s211 = sshll.u32 %s201, 4
          %s212 = int_to_ptr.vmem [resolvable:$true] %s211
          %217 = dma.vmem_to_hbm [thread:$0]  %s212, 256, %s210, %s198, 128, 128, 8
        $region36: #{conv_forward.5} parent=31 // pred_fallthru
          _
      $region32: #{conv_forward.5} parent=5 // pred_fallthru
        _
      %p218 = scmp.le.s32.totalorder 2, %s12
      // Predicated region
      $region37: #{conv_forward.5} parent=5 // pred_check
        %p219 = pneg %p218
      $region38: #{conv_forward.5} parent=5 // pred_check_branch
        %221 = sbr.rel (%p219) target = $region40
      $region39: #{conv_forward.5} parent=5 // pred_region
        %s222 = ssub.s32 %s12, 2
        // Predicated region
        $region41: #{conv_forward.5} parent=39 // pred_check
          %p223 = pneg %p109
        $region42: #{conv_forward.5} parent=39 // pred_check_branch
          %225 = sbr.rel (%p223) target = $region44
        $region43: #{conv_forward.5} parent=39 // pred_region
          %s226 = sand.u32 %s94, 1
          %s227 = scalar_lea.sflag [#allocation3], %s226
          %s228 = sand.u32 %s94, 1
          %s229 = smul.addr %s228, 16
          %s230 = scalar_lea.vmem [#allocation2], %s229
          %231 = dma.done %s227, 256
        $region44: #{conv_forward.5} parent=39 // pred_fallthru
          _
      $region40: #{conv_forward.5} parent=5 // pred_fallthru
        _
    $region6: #{conv_forward.5} parent=1 // loop_footer
      %s16 = sadd.s32 1, %s12
    $region7: #{conv_forward.5} parent=1 // loop_footer_branch
      %11 = sbr.rel target = $region3
    $region8: #{conv_forward.5} parent=1 // loop_exit
      _
    %232 = vsyncpa [#allocation3], 1
    %s233 = scalar_lea.sflag [#allocation3], 1
    %234 = vsyncpa %s233, 1

// kernel: conv_forward.4
$region0: #{conv_forward.4}
  #allocation0 [shape = 'u32[]', space=smem, size = 0x4, offset = 0x4, fixed_abs, tag = 'smem constant byte address 0x4 - core index']
  #allocation1 [shape = 'u32[144,128]{1,0:T(1,128)}', space=vmem, size = 0x12000, scoped, tag = 'internal scratch']
  %s0 = inlined_call_operand.vmem [shape: f32[32,16], index: 0, kind: input, shape index: {}]
  %s1 = inlined_call_operand.vmem [shape: f32[1,16], index: 1, kind: input, shape index: {}]
  %s2 = inlined_call_operand.vmem [shape: f32[1,16], index: 2, kind: input, shape index: {}]
  %s3 = inlined_call_operand.vmem [shape: f32[128,128], index: 3, kind: input, shape index: {}]
  %s4 = inlined_call_operand.vmem [shape: f32[1,128], index: 4, kind: input, shape index: {}]
  %s5 = inlined_call_operand.vmem [shape: f32[32,32], index: 5, kind: output, shape index: {0}]
  %s6 = inlined_call_operand.vmem [shape: f32[2,2,128], index: 6, kind: output, shape index: {1}]
  %7 = xla_tuple %s5, %s6
  %s8 = sld [smem:[#allocation0]]
  $region61: #{conv_forward.4} parent=0
    _
  %s10 = ssub.s32 1, %s8
  %s11 = scalar_select 0, %s10, %s8
  loop: start=0, step=1, limit=4
  $region2: #{conv_forward.4} parent=0 // loop_pre_header
    _
  $region3: #{conv_forward.4} parent=0 // loop_header
    %s13 = sphi 0, %s17
    %p14 = scmp.ge.s32.totalorder %s13, 4
    %s23 = sphi 0, %s25
    %s26 = sphi 0, %s23
    %s27 = sphi 0, %s26
    %s43 = sphi 0, %s27
    %s47 = sphi 0, %s47
    %s49 = sphi 0, %s47
    %s50 = sphi 0, %s49
    %s64 = sphi 0, %s50
    %s68 = sphi 0, %s68
    %s70 = sphi 0, %s68
    %s71 = sphi 0, %s70
    %s85 = sphi 0, %s71
    %s89 = sphi 0, %s89
    %s91 = sphi 0, %s89
    %s92 = sphi 0, %s91
    %s106 = sphi 0, %s92
    %s110 = sphi 0, %s110
    %s112 = sphi 0, %s110
    %s113 = sphi 0, %s112
    %s127 = sphi 0, %s113
    %s133 = sphi 0, %s135
    %s136 = sphi 0, %s133
    %s137 = sphi 0, %s136
    %s153 = sphi 0, %s137
    %s159 = sphi 0, %s161
    %s162 = sphi 0, %s159
    %s163 = sphi 0, %s162
    %s179 = sphi 0, %s163
  $region4: #{conv_forward.4} parent=0 // loop_header_branch
    %16 = sbr.rel (%p14) target = $region8
  $region5: #{conv_forward.4} parent=0 // loop_body
    %s18 = ssub.s32 %s13, 1
    %s19 = ssub.s32 %s13, 2
    %s20 = sadd.s32 %s13, 1
    %s21 = ssub.s32 %s13, %s20
    %p22 = scmp.eq.s32.totalorder %s21, 0
    %s24 = sadd.s32 %s23, 1
    %s25 = scalar_select %p22, %s23, %s24
    %p28 = pneg %p22
    %p29 = scmp.eq.s32.totalorder %s13, 1
    %p30 = por %p28, %p29
    %p31 = scmp.ne.s32.totalorder %s23, %s26
    %p32 = scmp.eq.s32.totalorder %s13, 0
    %p33 = por %p31, %p32
    %p34 = scmp.ne.s32.totalorder %s23, %s26
    %p35 = scmp.eq.s32.totalorder %s18, 1
    %p36 = por %p34, %p35
    %p37 = scmp.ne.s32.totalorder %s26, %s27
    %p38 = scmp.eq.s32.totalorder %s18, 0
    %p39 = por %p37, %p38
    %p40 = scmp.ne.s32.totalorder %s26, %s27
    %p41 = scmp.eq.s32.totalorder %s19, 1
    %p42 = por %p40, %p41
    %p44 = scmp.ne.s32.totalorder %s27, %s43
    %p45 = scmp.eq.s32.totalorder %s19, 0
    %p46 = por %p44, %p45
    %s48 = sadd.s32 %s47, 1
    %p51 = scmp.eq.s32.totalorder %s13, 1
    %p52 = scmp.ne.s32.totalorder %s47, %s49
    %p53 = scmp.eq.s32.totalorder %s13, 0
    %p54 = por %p52, %p53
    %p55 = scmp.ne.s32.totalorder %s47, %s49
    %p56 = scmp.eq.s32.totalorder %s18, 1
    %p57 = por %p55, %p56
    %p58 = scmp.ne.s32.totalorder %s49, %s50
    %p59 = scmp.eq.s32.totalorder %s18, 0
    %p60 = por %p58, %p59
    %p61 = scmp.ne.s32.totalorder %s49, %s50
    %p62 = scmp.eq.s32.totalorder %s19, 1
    %p63 = por %p61, %p62
    %p65 = scmp.ne.s32.totalorder %s50, %s64
    %p66 = scmp.eq.s32.totalorder %s19, 0
    %p67 = por %p65, %p66
    %s69 = sadd.s32 %s68, 1
    %p72 = scmp.eq.s32.totalorder %s13, 1
    %p73 = scmp.ne.s32.totalorder %s68, %s70
    %p74 = scmp.eq.s32.totalorder %s13, 0
    %p75 = por %p73, %p74
    %p76 = scmp.ne.s32.totalorder %s68, %s70
    %p77 = scmp.eq.s32.totalorder %s18, 1
    %p78 = por %p76, %p77
    %p79 = scmp.ne.s32.totalorder %s70, %s71
    %p80 = scmp.eq.s32.totalorder %s18, 0
    %p81 = por %p79, %p80
    %p82 = scmp.ne.s32.totalorder %s70, %s71
    %p83 = scmp.eq.s32.totalorder %s19, 1
    %p84 = por %p82, %p83
    %p86 = scmp.ne.s32.totalorder %s71, %s85
    %p87 = scmp.eq.s32.totalorder %s19, 0
    %p88 = por %p86, %p87
    %s90 = sadd.s32 %s89, 1
    %p93 = scmp.eq.s32.totalorder %s13, 1
    %p94 = scmp.ne.s32.totalorder %s89, %s91
    %p95 = scmp.eq.s32.totalorder %s13, 0
    %p96 = por %p94, %p95
    %p97 = scmp.ne.s32.totalorder %s89, %s91
    %p98 = scmp.eq.s32.totalorder %s18, 1
    %p99 = por %p97, %p98
    %p100 = scmp.ne.s32.totalorder %s91, %s92
    %p101 = scmp.eq.s32.totalorder %s18, 0
    %p102 = por %p100, %p101
    %p103 = scmp.ne.s32.totalorder %s91, %s92
    %p104 = scmp.eq.s32.totalorder %s19, 1
    %p105 = por %p103, %p104
    %p107 = scmp.ne.s32.totalorder %s92, %s106
    %p108 = scmp.eq.s32.totalorder %s19, 0
    %p109 = por %p107, %p108
    %s111 = sadd.s32 %s110, 1
    %p114 = scmp.eq.s32.totalorder %s13, 1
    %p115 = scmp.ne.s32.totalorder %s110, %s112
    %p116 = scmp.eq.s32.totalorder %s13, 0
    %p117 = por %p115, %p116
    %p118 = scmp.ne.s32.totalorder %s110, %s112
    %p119 = scmp.eq.s32.totalorder %s18, 1
    %p120 = por %p118, %p119
    %p121 = scmp.ne.s32.totalorder %s112, %s113
    %p122 = scmp.eq.s32.totalorder %s18, 0
    %p123 = por %p121, %p122
    %p124 = scmp.ne.s32.totalorder %s112, %s113
    %p125 = scmp.eq.s32.totalorder %s19, 1
    %p126 = por %p124, %p125
    %p128 = scmp.ne.s32.totalorder %s113, %s127
    %p129 = scmp.eq.s32.totalorder %s19, 0
    %p130 = por %p128, %p129
    %s131 = ssub.s32 %s13, %s20
    %p132 = scmp.eq.s32.totalorder %s131, 0
    %s134 = sadd.s32 %s133, 1
    %s135 = scalar_select %p132, %s133, %s134
    %p138 = pneg %p132
    %p139 = scmp.eq.s32.totalorder %s13, 1
    %p140 = por %p138, %p139
    %p141 = scmp.ne.s32.totalorder %s133, %s136
    %p142 = scmp.eq.s32.totalorder %s13, 0
    %p143 = por %p141, %p142
    %p144 = scmp.ne.s32.totalorder %s133, %s136
    %p145 = scmp.eq.s32.totalorder %s18, 1
    %p146 = por %p144, %p145
    %p147 = scmp.ne.s32.totalorder %s136, %s137
    %p148 = scmp.eq.s32.totalorder %s18, 0
    %p149 = por %p147, %p148
    %p150 = scmp.ne.s32.totalorder %s136, %s137
    %p151 = scmp.eq.s32.totalorder %s19, 1
    %p152 = por %p150, %p151
    %p154 = scmp.ne.s32.totalorder %s137, %s153
    %p155 = scmp.eq.s32.totalorder %s19, 0
    %p156 = por %p154, %p155
    %s157 = ssub.s32 %s13, %s20
    %p158 = scmp.eq.s32.totalorder %s157, 0
    %s160 = sadd.s32 %s159, 1
    %s161 = scalar_select %p158, %s159, %s160
    %p164 = pneg %p158
    %p165 = scmp.eq.s32.totalorder %s13, 1
    %p166 = por %p164, %p165
    %p167 = scmp.ne.s32.totalorder %s159, %s162
    %p168 = scmp.eq.s32.totalorder %s13, 0
    %p169 = por %p167, %p168
    %p170 = scmp.ne.s32.totalorder %s159, %s162
    %p171 = scmp.eq.s32.totalorder %s18, 1
    %p172 = por %p170, %p171
    %p173 = scmp.ne.s32.totalorder %s162, %s163
    %p174 = scmp.eq.s32.totalorder %s18, 0
    %p175 = por %p173, %p174
    %p176 = scmp.ne.s32.totalorder %s162, %s163
    %p177 = scmp.eq.s32.totalorder %s19, 1
    %p178 = por %p176, %p177
    %p180 = scmp.ne.s32.totalorder %s163, %s179
    %p181 = scmp.eq.s32.totalorder %s19, 0
    %p182 = por %p180, %p181
    %p183 = scmp.le.s32.totalorder 1, %s13
    %p184 = scmp.lt.s32.totalorder %s13, 3
    %p185 = pnand %p183, %p184
    %p186 = pneg %p185
    // Predicated region
    $region9: #{conv_forward.4} parent=5 // pred_check
      _
    $region10: #{conv_forward.4} parent=5 // pred_check_branch
      %188 = sbr.rel (%p185) target = $region12
    $region11: #{conv_forward.4} parent=5 // pred_region
      %s189 = ssub.s32 %s13, 1
      // Predicated region
      $region13: #{conv_forward.4} parent=11 // pred_check
        %p190 = pneg %p60
      $region14: #{conv_forward.4} parent=11 // pred_check_branch
        %192 = sbr.rel (%p190) target = $region16
      $region15: #{conv_forward.4} parent=11 // pred_region
        _
      $region16: #{conv_forward.4} parent=11 // pred_fallthru
        _
      // Predicated region
      $region17: #{conv_forward.4} parent=11 // pred_check
        %p193 = pneg %p81
      $region18: #{conv_forward.4} parent=11 // pred_check_branch
        %195 = sbr.rel (%p193) target = $region20
      $region19: #{conv_forward.4} parent=11 // pred_region
        _
      $region20: #{conv_forward.4} parent=11 // pred_fallthru
        _
      // Predicated region
      $region21: #{conv_forward.4} parent=11 // pred_check
        %p196 = pneg %p102
      $region22: #{conv_forward.4} parent=11 // pred_check_branch
        %198 = sbr.rel (%p196) target = $region24
      $region23: #{conv_forward.4} parent=11 // pred_region
        _
      $region24: #{conv_forward.4} parent=11 // pred_fallthru
        _
      // Predicated region
      $region25: #{conv_forward.4} parent=11 // pred_check
        %p199 = pneg %p123
      $region26: #{conv_forward.4} parent=11 // pred_check_branch
        %201 = sbr.rel (%p199) target = $region28
      $region27: #{conv_forward.4} parent=11 // pred_region
        _
      $region28: #{conv_forward.4} parent=11 // pred_fallthru
        _
    $region12: #{conv_forward.4} parent=5 // pred_fallthru
      _
    %p202 = scmp.lt.s32.totalorder %s13, 2
    // Predicated region
    $region29: #{conv_forward.4} parent=5 // pred_check
      %p203 = pneg %p202
    $region30: #{conv_forward.4} parent=5 // pred_check_branch
      %205 = sbr.rel (%p203) target = $region32
    $region31: #{conv_forward.4} parent=5 // pred_region
      // Predicated region
      $region33: #{conv_forward.4} parent=31 // pred_check
        %p206 = pneg %p33
      $region34: #{conv_forward.4} parent=31 // pred_check_branch
        %208 = sbr.rel (%p206) target = $region36
      $region35: #{conv_forward.4} parent=31 // pred_region
        %s209 = smul.u32 2, %s13
        %p210 = scmp.lt.s32.totalorder %s209, 3
        %s211 = scalar_select %p210, %s209, 3
        %s212 = smul.addr %s211, 8
        %s213 = scalar_lea.vmem %s0, %s212
        %s214 = smul.u32 2, %s13
      $region36: #{conv_forward.4} parent=31 // pred_fallthru
        _
    $region32: #{conv_forward.4} parent=5 // pred_fallthru
      _
    %p215 = scmp.le.s32.totalorder 1, %s13
    %p216 = scmp.lt.s32.totalorder %s13, 3
    %p217 = pnand %p215, %p216
    %p218 = pneg %p217
    // Predicated region
    $region37: #{conv_forward.4} parent=5 // pred_check
      _
    $region38: #{conv_forward.4} parent=5 // pred_check_branch
      %220 = sbr.rel (%p217) target = $region40
    $region39: #{conv_forward.4} parent=5 // pred_region
      %s221 = ssub.s32 %s13, 1
      %s222 = smul.u32 2, %s18
      %p223 = scmp.lt.s32.totalorder %s222, 3
      %s224 = scalar_select %p223, %s222, 3
      %s225 = smul.addr %s224, 8
      %s226 = scalar_lea.vmem %s0, %s225
      %p227 = pneg %p39
      %p228 = pneg %p36
      %p229 = pneg %p60
      %p230 = pneg %p57
      %p231 = pneg %p81
      %p232 = pneg %p78
      %p233 = pneg %p102
      %p234 = pneg %p99
      %p235 = pneg %p123
      %p236 = pneg %p120
      %p237 = pneg %p149
      %p238 = pneg %p146
      %s239 = smul.u32 2, %s18
      %p240 = scmp.lt.s32.totalorder %s239, 3
      %s241 = scalar_select %p240, %s239, 3
      %s242 = smul.addr %s241, 8
      %s243 = scalar_lea.vmem %s5, %s242
      %p244 = pneg %p175
      %p245 = pneg %p172
      %p246 = scmp.lt.s32.totalorder %s18, 1
      %s247 = scalar_select %p246, %s18, 1
      %s248 = smul.addr %s247, 2
      %s249 = scalar_lea.vmem %s6, %s248
      %s250 = smul.u32 2, %s18
      %p251 = scmp.lt.s32.totalorder %s250, 3
      %s252 = scalar_select %p251, %s250, 3
      %s253 = smul.addr %s252, 8
      %s254 = scalar_lea.vmem %s0, %s253
      %s255 = smul.u32 2, %s18
      %s256 = smul.u32 2, %s18
      %p257 = scmp.lt.s32.totalorder %s256, 3
      %s258 = scalar_select %p257, %s256, 3
      %s259 = smul.addr %s258, 8
      %s260 = scalar_lea.vmem %s5, %s259
      %s261 = smul.u32 2, %s18
      %p262 = scmp.lt.s32.totalorder %s18, 1
      %s263 = scalar_select %p262, %s18, 1
      %s264 = smul.addr %s263, 2
      %s265 = scalar_lea.vmem %s6, %s264
      %v266 = vld [vmem:[%s254] sm:$0xff]
      %v267 = vld [vmem:[%s254 + $0x8] sm:$0xff]
      %v268 = vld [vmem:[%s1] sm:$0x1]
      %v270 = vlaneseq
      %v271 = vshrl.u32 %v270, 7
      %v272 = vsub.s32 0, %v271
      %v273 = vrot.slane %v268, %v272
      %v275 = vmul.f32 %v266, %v273
      %v276 = vmul.f32 %v267, %v273
      %v277 = vld [vmem:[%s2] sm:$0x1]
      %v279 = vlaneseq
      %v280 = vshrl.u32 %v279, 7
      %v281 = vsub.s32 0, %v280
      %v282 = vrot.slane %v277, %v281
      %v284 = vadd.f32 %v275, %v282
      %v285 = vadd.f32 %v276, %v282
      %v286 = vmax.f32 %v284, 0.0
      %v287 = vmax.f32 %v285, 0.0
      %v288 = vld [vmem:[%s4] sm:$0x1]
      %v289 = vlaneseq
      %v290 = vshrl.u32 %v289, 7
      %v291 = vadd.s32 %v290, 8
      %vm292 = vcmp.lt.s32.totalorder %v290, 0
      %v293 = vsub.s32 0, %v290
      %v294 = vsel %vm292, %v293, %v290
      %v295 = vshrl.u32 %v294, 4
      %v296 = vand.u32 %v294, 15
      %v297 = vsub.s32 0, %v296
      %v298 = vsel %vm292, %v297, %v296
      %vm299 = vcmp.lt.s32.totalorder %v291, 0
      %v300 = vsub.s32 0, %v291
      %v301 = vsel %vm299, %v300, %v291
      %v302 = vshrl.u32 %v301, 4
      %v303 = vand.u32 %v301, 15
      %v304 = vsub.s32 0, %v303
      %v305 = vsel %vm299, %v304, %v303
      %vm306 = vcmp.ne.s32.totalorder %v298, 0
      %vm307 = vcmp.ne.s32.totalorder %v305, 0
      %vm308 = vcmp.lt.s32.totalorder %v298, 0
      %vm309 = vcmp.lt.s32.totalorder %v305, 0
      %vm310 = vmand %vm308, %vm306
      %vm311 = vmand %vm309, %vm307
      %v312 = vadd.s32 %v298, 16
      %v313 = vadd.s32 %v305, 16
      %v314 = vsel %vm310, %v312, %v298
      %v315 = vsel %vm311, %v313, %v305
      %vm316 = vcmp.ne.s32.totalorder %v314, 0
      %vm317 = vcmp.ne.s32.totalorder %v315, 0
      %v318 = vsel %vm316, 1, 0
      %v319 = vsel %vm317, 1, 0
      %v320 = vcvt.s32.f32 %v318
      %v321 = vcvt.s32.f32 %v319
      %vm322 = vcmp.ne.s32.totalorder %v314, 15
      %vm323 = vcmp.ne.s32.totalorder %v315, 15
      %v324 = vsel %vm322, 1, 0
      %v325 = vsel %vm323, 1, 0
      %v326 = vcvt.s32.f32 %v324
      %v327 = vcvt.s32.f32 %v325
      %vm328 = vcmask 130048
      %v329 = vsel %vm328, %v286, 0.0
      %v330 = vsel %vm328, %v287, 0.0
      %v331 = vrot.slane %v329, 7
      %v332 = vrot.slane %v330, 7
      %vm333 = vcmp.lt.s32.totalorder %v290, 1
      %v334 = vsel %vm333, %v331, %v332
      %v335 = vsel %vm333, %v332, %v331
      %v336 = vmul.f32 %v335, %v320
      %v337 = vmul.f32 %v334, %v321
      %v338 = vrot.slane %v329, 1
      %v339 = vrot.slane %v330, 1
      %vm340 = vcmp.lt.s32.totalorder %v290, 7
      %v341 = vsel %vm340, %v338, %v339
      %v342 = vsel %vm340, %v339, %v338
      %v343 = vmul.f32 %v341, %v326
      %v344 = vmul.f32 %v342, %v327
      %345 = vrot.lane.b32.xlu0 %v329, 16
      %v346 = vpop.permute.xlu0 %345
      %347 = vrot.lane.b32.xlu0 %v330, 16
      %v348 = vpop.permute.xlu0 %347
      %v349 = vadd.f32 %v336, %v346
      %v350 = vadd.f32 %v337, %v348
      %351 = vrot.lane.b32.xlu0 %v343, 32
      %v352 = vpop.permute.xlu0 %351
      %353 = vrot.lane.b32.xlu0 %v344, 32
      %v354 = vpop.permute.xlu0 %353
      %v355 = vadd.f32 %v349, %v352
      %v356 = vadd.f32 %v350, %v354
      %v357 = vld [vmem:[%s3] sm:$0xff]
      %v358 = vld [vmem:[%s3 + $0x8] sm:$0xff]
      %v359 = vld [vmem:[%s3 + $0x10] sm:$0xff]
      %v360 = vld [vmem:[%s3 + $0x18] sm:$0xff]
      %v361 = vld [vmem:[%s3 + $0x20] sm:$0xff]
      %v362 = vld [vmem:[%s3 + $0x28] sm:$0xff]
      %v363 = vld [vmem:[%s3 + $0x30] sm:$0xff]
      %v364 = vld [vmem:[%s3 + $0x38] sm:$0xff]
      %v365 = vld [vmem:[%s3 + $0x40] sm:$0xff]
      %v366 = vld [vmem:[%s3 + $0x48] sm:$0xff]
      %v367 = vld [vmem:[%s3 + $0x50] sm:$0xff]
      %v368 = vld [vmem:[%s3 + $0x58] sm:$0xff]
      %v369 = vld [vmem:[%s3 + $0x60] sm:$0xff]
      %v370 = vld [vmem:[%s3 + $0x68] sm:$0xff]
      %v371 = vld [vmem:[%s3 + $0x70] sm:$0xff]
      %v372 = vld [vmem:[%s3 + $0x78] sm:$0xff]
      %v374 = vlaneseq
      %v375 = vshrl.u32 %v374, 7
      %v376 = vsub.s32 0, %v375
      %v377 = vrot.slane %v288, %v376
      %379 = vmatprep.subr.mxu0 0.0
      %380 = vmatpush1.msra.mxu0 %v372
      %381 = vmatprep.subr.mxu0 0.0
      %382 = vmatpush1.msra.mxu0 %v371
      %383 = vmatprep.subr.mxu0 0.0
      %384 = vmatpush1.msra.mxu0 %v370
      %385 = vmatprep.subr.mxu0 0.0
      %386 = vmatpush1.msra.mxu0 %v369
      %387 = vmatprep.subr.mxu0 0.0
      %388 = vmatpush1.msra.mxu0 %v368
      %389 = vmatprep.subr.mxu0 0.0
      %390 = vmatpush1.msra.mxu0 %v367
      %391 = vmatprep.subr.mxu0 0.0
      %392 = vmatpush1.msra.mxu0 %v366
      %393 = vmatprep.subr.mxu0 0.0
      %394 = vmatpush1.msra.mxu0 %v365
      %395 = vmatprep.subr.mxu0 0.0
      %396 = vmatpush1.msra.mxu0 %v364
      %397 = vmatprep.subr.mxu0 0.0
      %398 = vmatpush1.msra.mxu0 %v363
      %399 = vmatprep.subr.mxu0 0.0
      %400 = vmatpush1.msra.mxu0 %v362
      %401 = vmatprep.subr.mxu0 0.0
      %402 = vmatpush1.msra.mxu0 %v361
      %403 = vmatprep.subr.mxu0 0.0
      %404 = vmatpush1.msra.mxu0 %v360
      %405 = vmatprep.subr.mxu0 0.0
      %406 = vmatpush1.msra.mxu0 %v359
      %407 = vmatprep.subr.mxu0 0.0
      %408 = vmatpush1.msra.mxu0 %v358
      %409 = vmatprep.subr.mxu0 0.0
      %410 = vmatpush1.msra.mxu0 %v357
      %411 = vmatprep.subr.mxu0 0.0
      %412 = vmatpush2.msra.mxu0 0.0
      %413 = vmatprep.subr.mxu0 0.0
      %414 = vmatpush2.msra.mxu0 0.0
      %415 = vmatprep.subr.mxu0 0.0
      %416 = vmatpush2.msra.mxu0 0.0
      %417 = vmatprep.subr.mxu0 0.0
      %418 = vmatpush2.msra.mxu0 0.0
      %419 = vmatprep.subr.mxu0 0.0
      %420 = vmatpush2.msra.mxu0 0.0
      %421 = vmatprep.subr.mxu0 0.0
      %422 = vmatpush2.msra.mxu0 0.0
      %423 = vmatprep.subr.mxu0 0.0
      %424 = vmatpush2.msra.mxu0 0.0
      %425 = vmatprep.subr.mxu0 0.0
      %426 = vmatpush2.msra.mxu0 0.0
      %427 = vmatprep.subr.mxu0 0.0
      %428 = vmatpush2.msra.mxu0 0.0
      %429 = vmatprep.subr.mxu0 0.0
      %430 = vmatpush2.msra.mxu0 0.0
      %431 = vmatprep.subr.mxu0 0.0
      %432 = vmatpush2.msra.mxu0 0.0
      %433 = vmatprep.subr.mxu0 0.0
      %434 = vmatpush2.msra.mxu0 0.0
      %435 = vmatprep.subr.mxu0 0.0
      %436 = vmatpush2.msra.mxu0 0.0
      %437 = vmatprep.subr.mxu0 0.0
      %438 = vmatpush2.msra.mxu0 0.0
      %439 = vmatprep.subr.mxu0 0.0
      %440 = vmatpush2.msra.mxu0 0.0
      %441 = vmatprep.subr.mxu0 0.0
      %442 = vmatpush2.msra.mxu0 0.0
      %443 = vmatprep.mubr.f32.mxu0 0.0
      %444 = vmatmul.mubr.f32.gmra.mxu0 %v355
      %v445 = vpop.f32.mrf.mxu0
      %v446 = vadd.f32 %v377, %v445
      %v447 = vpop.f32.mrf.mxu0
      %448 = vmatprep.mubr.f32.mxu0 0.0
      %449 = vmatmul.mubr.f32.gmra.mxu0 %v356
      %v450 = vpop.f32.mrf.mxu0
      %v451 = vadd.f32 %v377, %v450
      %v452 = vpop.f32.mrf.mxu0
      %453 = vdwg.mxu0
      %vm454 = vcmask 261120
      %455 = vst.msk [vmem:[%s260] sm:$0xff] %vm454, %v446
      %456 = vst.msk [vmem:[%s260 + $0x8] sm:$0xff] %vm454, %v451
      %v457 = vadd.f32 %v446, %v451
      %v458 = vrot.slane %v457, 4
      %v459 = vadd.f32 %v457, %v458
      %v460 = vrot.slane %v459, 2
      %v461 = vadd.f32 %v459, %v460
      %v462 = vrot.slane %v461, 1
      %v463 = vadd.f32 %v461, %v462
      %v464 = vmul.f32 %v446, %v446
      %v465 = vmul.f32 %v451, %v451
      %v466 = vadd.f32 %v464, %v465
      %v467 = vrot.slane %v466, 4
      %v468 = vadd.f32 %v466, %v467
      %v469 = vrot.slane %v468, 2
      %v470 = vadd.f32 %v468, %v469
      %v471 = vrot.slane %v470, 1
      %v472 = vadd.f32 %v470, %v471
      %vm473 = vcmask 1040384
      %v474 = vsel %vm473, %v463, %v472
      %475 = vst [vmem:[%s265] sm:$0x3] %v474
      %s476 = smul.u32 2, %s18
      %p477 = scmp.lt.s32.totalorder %s476, 3
      %s478 = scalar_select %p477, %s476, 3
      %s479 = smul.addr %s478, 8
      %s480 = scalar_lea.vmem %s5, %s479
      %p481 = scmp.lt.s32.totalorder %s18, 1
      %s482 = scalar_select %p481, %s18, 1
      %s483 = smul.addr %s482, 2
      %s484 = scalar_lea.vmem %s6, %s483
      // Predicated region
      $region41: #{conv_forward.4} parent=39 // pred_check
        %p485 = pneg %p146
      $region42: #{conv_forward.4} parent=39 // pred_check_branch
        %487 = sbr.rel (%p485) target = $region44
      $region43: #{conv_forward.4} parent=39 // pred_region
        %s488 = smul.u32 2, %s18
      $region44: #{conv_forward.4} parent=39 // pred_fallthru
        _
      // Predicated region
      $region45: #{conv_forward.4} parent=39 // pred_check
        %p489 = pneg %p172
      $region46: #{conv_forward.4} parent=39 // pred_check_branch
        %491 = sbr.rel (%p489) target = $region48
      $region47: #{conv_forward.4} parent=39 // pred_region
        _
      $region48: #{conv_forward.4} parent=39 // pred_fallthru
        _
    $region40: #{conv_forward.4} parent=5 // pred_fallthru
      _
    %p492 = scmp.le.s32.totalorder 2, %s13
    // Predicated region
    $region49: #{conv_forward.4} parent=5 // pred_check
      %p493 = pneg %p492
    $region50: #{conv_forward.4} parent=5 // pred_check_branch
      %495 = sbr.rel (%p493) target = $region52
    $region51: #{conv_forward.4} parent=5 // pred_region
      %s496 = ssub.s32 %s13, 2
      // Predicated region
      $region53: #{conv_forward.4} parent=51 // pred_check
        %p497 = pneg %p152
      $region54: #{conv_forward.4} parent=51 // pred_check_branch
        %499 = sbr.rel (%p497) target = $region56
      $region55: #{conv_forward.4} parent=51 // pred_region
        %s500 = smul.u32 2, %s19
        %p501 = scmp.lt.s32.totalorder %s500, 3
        %s502 = scalar_select %p501, %s500, 3
        %s503 = smul.addr %s502, 8
        %s504 = scalar_lea.vmem %s5, %s503
      $region56: #{conv_forward.4} parent=51 // pred_fallthru
        _
      // Predicated region
      $region57: #{conv_forward.4} parent=51 // pred_check
        %p505 = pneg %p178
      $region58: #{conv_forward.4} parent=51 // pred_check_branch
        %507 = sbr.rel (%p505) target = $region60
      $region59: #{conv_forward.4} parent=51 // pred_region
        %p508 = scmp.lt.s32.totalorder %s19, 1
        %s509 = scalar_select %p508, %s19, 1
        %s510 = smul.addr %s509, 2
        %s511 = scalar_lea.vmem %s6, %s510
      $region60: #{conv_forward.4} parent=51 // pred_fallthru
        _
    $region52: #{conv_forward.4} parent=5 // pred_fallthru
      _
  $region6: #{conv_forward.4} parent=0 // loop_footer
    %s17 = sadd.s32 1, %s13
  $region7: #{conv_forward.4} parent=0 // loop_footer_branch
    %12 = sbr.rel target = $region3
  $region8: #{conv_forward.4} parent=0 // loop_exit
    _

// kernel: conv_forward.3
$region0: #{conv_forward.3}
  #allocation0 [shape = 'u32[]', space=smem, size = 0x4, offset = 0x4, fixed_abs, tag = 'smem constant byte address 0x4 - core index']
  #allocation1 [shape = 'u32[144,128]{1,0:T(1,128)}', space=vmem, size = 0x12000, scoped, tag = 'internal scratch']
  %s0 = inlined_call_operand.vmem [shape: f32[32,4], index: 0, kind: input, shape index: {}]
  %s1 = inlined_call_operand.vmem [shape: f32[128,128], index: 1, kind: input, shape index: {}]
  %s2 = inlined_call_operand.vmem [shape: f32[1,128], index: 2, kind: input, shape index: {}]
  %s3 = inlined_call_operand.vmem [shape: f32[32,16], index: 3, kind: output, shape index: {0}]
  %s4 = inlined_call_operand.vmem [shape: f32[2,2,128], index: 4, kind: output, shape index: {1}]
  %5 = xla_tuple %s3, %s4
  %s6 = sld [smem:[#allocation0]]
  $region53: #{conv_forward.3} parent=0
    _
  %s8 = ssub.s32 1, %s6
  %s9 = scalar_select 0, %s8, %s6
  loop: start=0, step=1, limit=4
  $region2: #{conv_forward.3} parent=0 // loop_pre_header
    _
  $region3: #{conv_forward.3} parent=0 // loop_header
    %s11 = sphi 0, %s15
    %p12 = scmp.ge.s32.totalorder %s11, 4
    %s21 = sphi 0, %s23
    %s24 = sphi 0, %s21
    %s25 = sphi 0, %s24
    %s41 = sphi 0, %s25
    %s45 = sphi 0, %s45
    %s47 = sphi 0, %s45
    %s48 = sphi 0, %s47
    %s62 = sphi 0, %s48
    %s66 = sphi 0, %s66
    %s68 = sphi 0, %s66
    %s69 = sphi 0, %s68
    %s83 = sphi 0, %s69
    %s89 = sphi 0, %s91
    %s92 = sphi 0, %s89
    %s93 = sphi 0, %s92
    %s109 = sphi 0, %s93
    %s115 = sphi 0, %s117
    %s118 = sphi 0, %s115
    %s119 = sphi 0, %s118
    %s135 = sphi 0, %s119
  $region4: #{conv_forward.3} parent=0 // loop_header_branch
    %14 = sbr.rel (%p12) target = $region8
  $region5: #{conv_forward.3} parent=0 // loop_body
    %s16 = ssub.s32 %s11, 1
    %s17 = ssub.s32 %s11, 2
    %s18 = sadd.s32 %s11, 1
    %s19 = ssub.s32 %s11, %s18
    %p20 = scmp.eq.s32.totalorder %s19, 0
    %s22 = sadd.s32 %s21, 1
    %s23 = scalar_select %p20, %s21, %s22
    %p26 = pneg %p20
    %p27 = scmp.eq.s32.totalorder %s11, 1
    %p28 = por %p26, %p27
    %p29 = scmp.ne.s32.totalorder %s21, %s24
    %p30 = scmp.eq.s32.totalorder %s11, 0
    %p31 = por %p29, %p30
    %p32 = scmp.ne.s32.totalorder %s21, %s24
    %p33 = scmp.eq.s32.totalorder %s16, 1
    %p34 = por %p32, %p33
    %p35 = scmp.ne.s32.totalorder %s24, %s25
    %p36 = scmp.eq.s32.totalorder %s16, 0
    %p37 = por %p35, %p36
    %p38 = scmp.ne.s32.totalorder %s24, %s25
    %p39 = scmp.eq.s32.totalorder %s17, 1
    %p40 = por %p38, %p39
    %p42 = scmp.ne.s32.totalorder %s25, %s41
    %p43 = scmp.eq.s32.totalorder %s17, 0
    %p44 = por %p42, %p43
    %s46 = sadd.s32 %s45, 1
    %p49 = scmp.eq.s32.totalorder %s11, 1
    %p50 = scmp.ne.s32.totalorder %s45, %s47
    %p51 = scmp.eq.s32.totalorder %s11, 0
    %p52 = por %p50, %p51
    %p53 = scmp.ne.s32.totalorder %s45, %s47
    %p54 = scmp.eq.s32.totalorder %s16, 1
    %p55 = por %p53, %p54
    %p56 = scmp.ne.s32.totalorder %s47, %s48
    %p57 = scmp.eq.s32.totalorder %s16, 0
    %p58 = por %p56, %p57
    %p59 = scmp.ne.s32.totalorder %s47, %s48
    %p60 = scmp.eq.s32.totalorder %s17, 1
    %p61 = por %p59, %p60
    %p63 = scmp.ne.s32.totalorder %s48, %s62
    %p64 = scmp.eq.s32.totalorder %s17, 0
    %p65 = por %p63, %p64
    %s67 = sadd.s32 %s66, 1
    %p70 = scmp.eq.s32.totalorder %s11, 1
    %p71 = scmp.ne.s32.totalorder %s66, %s68
    %p72 = scmp.eq.s32.totalorder %s11, 0
    %p73 = por %p71, %p72
    %p74 = scmp.ne.s32.totalorder %s66, %s68
    %p75 = scmp.eq.s32.totalorder %s16, 1
    %p76 = por %p74, %p75
    %p77 = scmp.ne.s32.totalorder %s68, %s69
    %p78 = scmp.eq.s32.totalorder %s16, 0
    %p79 = por %p77, %p78
    %p80 = scmp.ne.s32.totalorder %s68, %s69
    %p81 = scmp.eq.s32.totalorder %s17, 1
    %p82 = por %p80, %p81
    %p84 = scmp.ne.s32.totalorder %s69, %s83
    %p85 = scmp.eq.s32.totalorder %s17, 0
    %p86 = por %p84, %p85
    %s87 = ssub.s32 %s11, %s18
    %p88 = scmp.eq.s32.totalorder %s87, 0
    %s90 = sadd.s32 %s89, 1
    %s91 = scalar_select %p88, %s89, %s90
    %p94 = pneg %p88
    %p95 = scmp.eq.s32.totalorder %s11, 1
    %p96 = por %p94, %p95
    %p97 = scmp.ne.s32.totalorder %s89, %s92
    %p98 = scmp.eq.s32.totalorder %s11, 0
    %p99 = por %p97, %p98
    %p100 = scmp.ne.s32.totalorder %s89, %s92
    %p101 = scmp.eq.s32.totalorder %s16, 1
    %p102 = por %p100, %p101
    %p103 = scmp.ne.s32.totalorder %s92, %s93
    %p104 = scmp.eq.s32.totalorder %s16, 0
    %p105 = por %p103, %p104
    %p106 = scmp.ne.s32.totalorder %s92, %s93
    %p107 = scmp.eq.s32.totalorder %s17, 1
    %p108 = por %p106, %p107
    %p110 = scmp.ne.s32.totalorder %s93, %s109
    %p111 = scmp.eq.s32.totalorder %s17, 0
    %p112 = por %p110, %p111
    %s113 = ssub.s32 %s11, %s18
    %p114 = scmp.eq.s32.totalorder %s113, 0
    %s116 = sadd.s32 %s115, 1
    %s117 = scalar_select %p114, %s115, %s116
    %p120 = pneg %p114
    %p121 = scmp.eq.s32.totalorder %s11, 1
    %p122 = por %p120, %p121
    %p123 = scmp.ne.s32.totalorder %s115, %s118
    %p124 = scmp.eq.s32.totalorder %s11, 0
    %p125 = por %p123, %p124
    %p126 = scmp.ne.s32.totalorder %s115, %s118
    %p127 = scmp.eq.s32.totalorder %s16, 1
    %p128 = por %p126, %p127
    %p129 = scmp.ne.s32.totalorder %s118, %s119
    %p130 = scmp.eq.s32.totalorder %s16, 0
    %p131 = por %p129, %p130
    %p132 = scmp.ne.s32.totalorder %s118, %s119
    %p133 = scmp.eq.s32.totalorder %s17, 1
    %p134 = por %p132, %p133
    %p136 = scmp.ne.s32.totalorder %s119, %s135
    %p137 = scmp.eq.s32.totalorder %s17, 0
    %p138 = por %p136, %p137
    %p139 = scmp.le.s32.totalorder 1, %s11
    %p140 = scmp.lt.s32.totalorder %s11, 3
    %p141 = pnand %p139, %p140
    %p142 = pneg %p141
    // Predicated region
    $region9: #{conv_forward.3} parent=5 // pred_check
      _
    $region10: #{conv_forward.3} parent=5 // pred_check_branch
      %144 = sbr.rel (%p141) target = $region12
    $region11: #{conv_forward.3} parent=5 // pred_region
      %s145 = ssub.s32 %s11, 1
      // Predicated region
      $region13: #{conv_forward.3} parent=11 // pred_check
        %p146 = pneg %p58
      $region14: #{conv_forward.3} parent=11 // pred_check_branch
        %148 = sbr.rel (%p146) target = $region16
      $region15: #{conv_forward.3} parent=11 // pred_region
        _
      $region16: #{conv_forward.3} parent=11 // pred_fallthru
        _
      // Predicated region
      $region17: #{conv_forward.3} parent=11 // pred_check
        %p149 = pneg %p79
      $region18: #{conv_forward.3} parent=11 // pred_check_branch
        %151 = sbr.rel (%p149) target = $region20
      $region19: #{conv_forward.3} parent=11 // pred_region
        _
      $region20: #{conv_forward.3} parent=11 // pred_fallthru
        _
    $region12: #{conv_forward.3} parent=5 // pred_fallthru
      _
    %p152 = scmp.lt.s32.totalorder %s11, 2
    // Predicated region
    $region21: #{conv_forward.3} parent=5 // pred_check
      %p153 = pneg %p152
    $region22: #{conv_forward.3} parent=5 // pred_check_branch
      %155 = sbr.rel (%p153) target = $region24
    $region23: #{conv_forward.3} parent=5 // pred_region
      // Predicated region
      $region25: #{conv_forward.3} parent=23 // pred_check
        %p156 = pneg %p31
      $region26: #{conv_forward.3} parent=23 // pred_check_branch
        %158 = sbr.rel (%p156) target = $region28
      $region27: #{conv_forward.3} parent=23 // pred_region
        %s159 = smul.u32 2, %s11
        %p160 = scmp.lt.s32.totalorder %s159, 3
        %s161 = scalar_select %p160, %s159, 3
        %s162 = smul.addr %s161, 8
        %s163 = scalar_lea.vmem %s0, %s162
        %s164 = smul.u32 2, %s11
      $region28: #{conv_forward.3} parent=23 // pred_fallthru
        _
    $region24: #{conv_forward.3} parent=5 // pred_fallthru
      _
    %p165 = scmp.le.s32.totalorder 1, %s11
    %p166 = scmp.lt.s32.totalorder %s11, 3
    %p167 = pnand %p165, %p166
    %p168 = pneg %p167
    // Predicated region
    $region29: #{conv_forward.3} parent=5 // pred_check
      _
    $region30: #{conv_forward.3} parent=5 // pred_check_branch
      %170 = sbr.rel (%p167) target = $region32
    $region31: #{conv_forward.3} parent=5 // pred_region
      %s171 = ssub.s32 %s11, 1
      %s172 = smul.u32 2, %s16
      %p173 = scmp.lt.s32.totalorder %s172, 3
      %s174 = scalar_select %p173, %s172, 3
      %s175 = smul.addr %s174, 8
      %s176 = scalar_lea.vmem %s0, %s175
      %p177 = pneg %p37
      %p178 = pneg %p34
      %p179 = pneg %p58
      %p180 = pneg %p55
      %p181 = pneg %p79
      %p182 = pneg %p76
      %p183 = pneg %p105
      %p184 = pneg %p102
      %s185 = smul.u32 2, %s16
      %p186 = scmp.lt.s32.totalorder %s185, 3
      %s187 = scalar_select %p186, %s185, 3
      %s188 = smul.addr %s187, 8
      %s189 = scalar_lea.vmem %s3, %s188
      %p190 = pneg %p131
      %p191 = pneg %p128
      %p192 = scmp.lt.s32.totalorder %s16, 1
      %s193 = scalar_select %p192, %s16, 1
      %s194 = smul.addr %s193, 2
      %s195 = scalar_lea.vmem %s4, %s194
      %s196 = smul.u32 2, %s16
      %p197 = scmp.lt.s32.totalorder %s196, 3
      %s198 = scalar_select %p197, %s196, 3
      %s199 = smul.addr %s198, 8
      %s200 = scalar_lea.vmem %s0, %s199
      %s201 = smul.u32 2, %s16
      %s202 = smul.u32 2, %s16
      %p203 = scmp.lt.s32.totalorder %s202, 3
      %s204 = scalar_select %p203, %s202, 3
      %s205 = smul.addr %s204, 8
      %s206 = scalar_lea.vmem %s3, %s205
      %s207 = smul.u32 2, %s16
      %p208 = scmp.lt.s32.totalorder %s16, 1
      %s209 = scalar_select %p208, %s16, 1
      %s210 = smul.addr %s209, 2
      %s211 = scalar_lea.vmem %s4, %s210
      %v212 = vld [vmem:[%s200] sm:$0xff]
      %v213 = vld [vmem:[%s200 + $0x8] sm:$0xff]
      %v214 = vld [vmem:[%s2] sm:$0x1]
      %v215 = vlaneseq
      %v216 = vshrl.u32 %v215, 7
      %v217 = vadd.s32 %v216, 8
      %vm218 = vcmp.lt.s32.totalorder %v216, 0
      %v219 = vsub.s32 0, %v216
      %v220 = vsel %vm218, %v219, %v216
      %v221 = vshrl.u32 %v220, 4
      %v222 = vand.u32 %v220, 15
      %v223 = vsub.s32 0, %v222
      %v224 = vsel %vm218, %v223, %v222
      %vm225 = vcmp.lt.s32.totalorder %v217, 0
      %v226 = vsub.s32 0, %v217
      %v227 = vsel %vm225, %v226, %v217
      %v228 = vshrl.u32 %v227, 4
      %v229 = vand.u32 %v227, 15
      %v230 = vsub.s32 0, %v229
      %v231 = vsel %vm225, %v230, %v229
      %vm232 = vcmp.ne.s32.totalorder %v224, 0
      %vm233 = vcmp.ne.s32.totalorder %v231, 0
      %vm234 = vcmp.lt.s32.totalorder %v224, 0
      %vm235 = vcmp.lt.s32.totalorder %v231, 0
      %vm236 = vmand %vm234, %vm232
      %vm237 = vmand %vm235, %vm233
      %v238 = vadd.s32 %v224, 16
      %v239 = vadd.s32 %v231, 16
      %v240 = vsel %vm236, %v238, %v224
      %v241 = vsel %vm237, %v239, %v231
      %vm242 = vcmp.ne.s32.totalorder %v240, 0
      %vm243 = vcmp.ne.s32.totalorder %v241, 0
      %v244 = vsel %vm242, 1, 0
      %v245 = vsel %vm243, 1, 0
      %v246 = vcvt.s32.f32 %v244
      %v247 = vcvt.s32.f32 %v245
      %vm248 = vcmp.ne.s32.totalorder %v240, 15
      %vm249 = vcmp.ne.s32.totalorder %v241, 15
      %v250 = vsel %vm248, 1, 0
      %v251 = vsel %vm249, 1, 0
      %v252 = vcvt.s32.f32 %v250
      %v253 = vcvt.s32.f32 %v251
      %vm254 = vcmask 31744
      %v255 = vsel %vm254, %v212, 0.0
      %v256 = vsel %vm254, %v213, 0.0
      %v257 = vrot.slane %v255, 7
      %v258 = vrot.slane %v256, 7
      %vm259 = vcmp.lt.s32.totalorder %v216, 1
      %v260 = vsel %vm259, %v257, %v258
      %v261 = vsel %vm259, %v258, %v257
      %v262 = vmul.f32 %v261, %v246
      %v263 = vmul.f32 %v260, %v247
      %v264 = vrot.slane %v255, 1
      %v265 = vrot.slane %v256, 1
      %vm266 = vcmp.lt.s32.totalorder %v216, 7
      %v267 = vsel %vm266, %v264, %v265
      %v268 = vsel %vm266, %v265, %v264
      %v269 = vmul.f32 %v267, %v252
      %v270 = vmul.f32 %v268, %v253
      %271 = vrot.lane.b32.xlu0 %v255, 4
      %v272 = vpop.permute.xlu0 %271
      %273 = vrot.lane.b32.xlu0 %v256, 4
      %v274 = vpop.permute.xlu0 %273
      %v275 = vadd.f32 %v262, %v272
      %v276 = vadd.f32 %v263, %v274
      %277 = vrot.lane.b32.xlu0 %v269, 8
      %v278 = vpop.permute.xlu0 %277
      %279 = vrot.lane.b32.xlu0 %v270, 8
      %v280 = vpop.permute.xlu0 %279
      %v281 = vadd.f32 %v275, %v278
      %v282 = vadd.f32 %v276, %v280
      %v283 = vld [vmem:[%s1] sm:$0xff]
      %v284 = vld [vmem:[%s1 + $0x8] sm:$0xff]
      %v285 = vld [vmem:[%s1 + $0x10] sm:$0xff]
      %v286 = vld [vmem:[%s1 + $0x18] sm:$0xff]
      %v287 = vld [vmem:[%s1 + $0x20] sm:$0xff]
      %v288 = vld [vmem:[%s1 + $0x28] sm:$0xff]
      %v289 = vld [vmem:[%s1 + $0x30] sm:$0xff]
      %v290 = vld [vmem:[%s1 + $0x38] sm:$0xff]
      %v291 = vld [vmem:[%s1 + $0x40] sm:$0xff]
      %v292 = vld [vmem:[%s1 + $0x48] sm:$0xff]
      %v293 = vld [vmem:[%s1 + $0x50] sm:$0xff]
      %v294 = vld [vmem:[%s1 + $0x58] sm:$0xff]
      %v295 = vld [vmem:[%s1 + $0x60] sm:$0xff]
      %v296 = vld [vmem:[%s1 + $0x68] sm:$0xff]
      %v297 = vld [vmem:[%s1 + $0x70] sm:$0xff]
      %v298 = vld [vmem:[%s1 + $0x78] sm:$0xff]
      %v300 = vlaneseq
      %v301 = vshrl.u32 %v300, 7
      %v302 = vsub.s32 0, %v301
      %v303 = vrot.slane %v214, %v302
      %305 = vmatprep.subr.mxu0 0.0
      %306 = vmatpush1.msra.mxu0 %v298
      %307 = vmatprep.subr.mxu0 0.0
      %308 = vmatpush1.msra.mxu0 %v297
      %309 = vmatprep.subr.mxu0 0.0
      %310 = vmatpush1.msra.mxu0 %v296
      %311 = vmatprep.subr.mxu0 0.0
      %312 = vmatpush1.msra.mxu0 %v295
      %313 = vmatprep.subr.mxu0 0.0
      %314 = vmatpush1.msra.mxu0 %v294
      %315 = vmatprep.subr.mxu0 0.0
      %316 = vmatpush1.msra.mxu0 %v293
      %317 = vmatprep.subr.mxu0 0.0
      %318 = vmatpush1.msra.mxu0 %v292
      %319 = vmatprep.subr.mxu0 0.0
      %320 = vmatpush1.msra.mxu0 %v291
      %321 = vmatprep.subr.mxu0 0.0
      %322 = vmatpush1.msra.mxu0 %v290
      %323 = vmatprep.subr.mxu0 0.0
      %324 = vmatpush1.msra.mxu0 %v289
      %325 = vmatprep.subr.mxu0 0.0
      %326 = vmatpush1.msra.mxu0 %v288
      %327 = vmatprep.subr.mxu0 0.0
      %328 = vmatpush1.msra.mxu0 %v287
      %329 = vmatprep.subr.mxu0 0.0
      %330 = vmatpush1.msra.mxu0 %v286
      %331 = vmatprep.subr.mxu0 0.0
      %332 = vmatpush1.msra.mxu0 %v285
      %333 = vmatprep.subr.mxu0 0.0
      %334 = vmatpush1.msra.mxu0 %v284
      %335 = vmatprep.subr.mxu0 0.0
      %336 = vmatpush1.msra.mxu0 %v283
      %337 = vmatprep.subr.mxu0 0.0
      %338 = vmatpush2.msra.mxu0 0.0
      %339 = vmatprep.subr.mxu0 0.0
      %340 = vmatpush2.msra.mxu0 0.0
      %341 = vmatprep.subr.mxu0 0.0
      %342 = vmatpush2.msra.mxu0 0.0
      %343 = vmatprep.subr.mxu0 0.0
      %344 = vmatpush2.msra.mxu0 0.0
      %345 = vmatprep.subr.mxu0 0.0
      %346 = vmatpush2.msra.mxu0 0.0
      %347 = vmatprep.subr.mxu0 0.0
      %348 = vmatpush2.msra.mxu0 0.0
      %349 = vmatprep.subr.mxu0 0.0
      %350 = vmatpush2.msra.mxu0 0.0
      %351 = vmatprep.subr.mxu0 0.0
      %352 = vmatpush2.msra.mxu0 0.0
      %353 = vmatprep.subr.mxu0 0.0
      %354 = vmatpush2.msra.mxu0 0.0
      %355 = vmatprep.subr.mxu0 0.0
      %356 = vmatpush2.msra.mxu0 0.0
      %357 = vmatprep.subr.mxu0 0.0
      %358 = vmatpush2.msra.mxu0 0.0
      %359 = vmatprep.subr.mxu0 0.0
      %360 = vmatpush2.msra.mxu0 0.0
      %361 = vmatprep.subr.mxu0 0.0
      %362 = vmatpush2.msra.mxu0 0.0
      %363 = vmatprep.subr.mxu0 0.0
      %364 = vmatpush2.msra.mxu0 0.0
      %365 = vmatprep.subr.mxu0 0.0
      %366 = vmatpush2.msra.mxu0 0.0
      %367 = vmatprep.subr.mxu0 0.0
      %368 = vmatpush2.msra.mxu0 0.0
      %369 = vmatprep.mubr.f32.mxu0 0.0
      %370 = vmatmul.mubr.f32.gmra.mxu0 %v281
      %v371 = vpop.f32.mrf.mxu0
      %v372 = vadd.f32 %v303, %v371
      %v373 = vpop.f32.mrf.mxu0
      %374 = vmatprep.mubr.f32.mxu0 0.0
      %375 = vmatmul.mubr.f32.gmra.mxu0 %v282
      %v376 = vpop.f32.mrf.mxu0
      %v377 = vadd.f32 %v303, %v376
      %v378 = vpop.f32.mrf.mxu0
      %379 = vdwg.mxu0
      %vm380 = vcmask 130048
      %381 = vst.msk [vmem:[%s206] sm:$0xff] %vm380, %v372
      %382 = vst.msk [vmem:[%s206 + $0x8] sm:$0xff] %vm380, %v377
      %v383 = vadd.f32 %v372, %v377
      %v384 = vrot.slane %v383, 4
      %v385 = vadd.f32 %v383, %v384
      %v386 = vrot.slane %v385, 2
      %v387 = vadd.f32 %v385, %v386
      %v388 = vrot.slane %v387, 1
      %v389 = vadd.f32 %v387, %v388
      %v390 = vmul.f32 %v372, %v372
      %v391 = vmul.f32 %v377, %v377
      %v392 = vadd.f32 %v390, %v391
      %v393 = vrot.slane %v392, 4
      %v394 = vadd.f32 %v392, %v393
      %v395 = vrot.slane %v394, 2
      %v396 = vadd.f32 %v394, %v395
      %v397 = vrot.slane %v396, 1
      %v398 = vadd.f32 %v396, %v397
      %vm399 = vcmask 1040384
      %v400 = vsel %vm399, %v389, %v398
      %401 = vst [vmem:[%s211] sm:$0x3] %v400
      %s402 = smul.u32 2, %s16
      %p403 = scmp.lt.s32.totalorder %s402, 3
      %s404 = scalar_select %p403, %s402, 3
      %s405 = smul.addr %s404, 8
      %s406 = scalar_lea.vmem %s3, %s405
      %p407 = scmp.lt.s32.totalorder %s16, 1
      %s408 = scalar_select %p407, %s16, 1
      %s409 = smul.addr %s408, 2
      %s410 = scalar_lea.vmem %s4, %s409
      // Predicated region
      $region33: #{conv_forward.3} parent=31 // pred_check
        %p411 = pneg %p102
      $region34: #{conv_forward.3} parent=31 // pred_check_branch
        %413 = sbr.rel (%p411) target = $region36
      $region35: #{conv_forward.3} parent=31 // pred_region
        %s414 = smul.u32 2, %s16
      $region36: #{conv_forward.3} parent=31 // pred_fallthru
        _
      // Predicated region
      $region37: #{conv_forward.3} parent=31 // pred_check
        %p415 = pneg %p128
      $region38: #{conv_forward.3} parent=31 // pred_check_branch
        %417 = sbr.rel (%p415) target = $region40
      $region39: #{conv_forward.3} parent=31 // pred_region
        _
      $region40: #{conv_forward.3} parent=31 // pred_fallthru
        _
    $region32: #{conv_forward.3} parent=5 // pred_fallthru
      _
    %p418 = scmp.le.s32.totalorder 2, %s11
    // Predicated region
    $region41: #{conv_forward.3} parent=5 // pred_check
      %p419 = pneg %p418
    $region42: #{conv_forward.3} parent=5 // pred_check_branch
      %421 = sbr.rel (%p419) target = $region44
    $region43: #{conv_forward.3} parent=5 // pred_region
      %s422 = ssub.s32 %s11, 2
      // Predicated region
      $region45: #{conv_forward.3} parent=43 // pred_check
        %p423 = pneg %p108
      $region46: #{conv_forward.3} parent=43 // pred_check_branch
        %425 = sbr.rel (%p423) target = $region48
      $region47: #{conv_forward.3} parent=43 // pred_region
        %s426 = smul.u32 2, %s17
        %p427 = scmp.lt.s32.totalorder %s426, 3
        %s428 = scalar_select %p427, %s426, 3
        %s429 = smul.addr %s428, 8
        %s430 = scalar_lea.vmem %s3, %s429
      $region48: #{conv_forward.3} parent=43 // pred_fallthru
        _
      // Predicated region
      $region49: #{conv_forward.3} parent=43 // pred_check
        %p431 = pneg %p134
      $region50: #{conv_forward.3} parent=43 // pred_check_branch
        %433 = sbr.rel (%p431) target = $region52
      $region51: #{conv_forward.3} parent=43 // pred_region
        %p434 = scmp.lt.s32.totalorder %s17, 1
        %s435 = scalar_select %p434, %s17, 1
        %s436 = smul.addr %s435, 2
        %s437 = scalar_lea.vmem %s4, %s436
      $region52: #{conv_forward.3} parent=43 // pred_fallthru
        _
    $region44: #{conv_forward.3} parent=5 // pred_fallthru
      _
  $region6: #{conv_forward.3} parent=0 // loop_footer
    %s15 = sadd.s32 1, %s11
  $region7: #{conv_forward.3} parent=0 // loop_footer_branch
    %10 = sbr.rel target = $region3
  $region8: #{conv_forward.3} parent=0 // loop_exit
    _

</llo_original>
